<compile_context>
chip_gen: v6e
topology: v6e:2x2x1
jax: 0.10.0
libtpu: 0.0.40
codegen_flags: <defaults>
</compile_context>

<pallas_src>
import jax
import jax.numpy as jnp
from jax import lax
from jax.experimental import pallas as pl
from jax.experimental.pallas import tpu as pltpu

# ---------------- problem sizes ----------------------------------------------
N_NODES = 16        # nodes per sampled block
INPUT_DIM = 32
HIDDEN_DIM = 32
NUM_HEADS = 8
HEAD_DIM = HIDDEN_DIM // NUM_HEADS
OUT_DIM = 1         # forward's .squeeze(-1) implies out_dim == 1
NUM_IDS = 8         # length of data_list_*[t][1]
NEG_SLOPE = 0.2
LANES = NUM_HEADS * N_NODES   # 128: all-heads logits in one lane-dense slab


# ---------------- fused GAT + L2-normalize kernel (one grid step per graph) ---
def gat_kernel(x_ref, adj_ref, w_ref, alr_ref, selh_ref, seln_ref,
               redh_ref, sdup_ref, bmask_ref, o_ref):
    x = x_ref[...]                                       # (N, F_in)
    adj = adj_ref[...]                                   # (N, N)

    # projection to all heads at once, and fused e_l/e_r attention logits
    wh = jnp.dot(x, w_ref[...], preferred_element_type=jnp.float32)     # (N, H)
    e = jnp.dot(wh, alr_ref[...], preferred_element_type=jnp.float32)   # (N, 2*heads)
    e_l = e[:, :NUM_HEADS]                               # (N, heads)
    e_r = e[:, NUM_HEADS:]                               # (N, heads)

    sel_head = selh_ref[...]                             # (heads, 128): 1 iff col//N == h
    sel_node = seln_ref[...]                             # (N, 128):     1 iff col%N  == j

    # lane-dense all-heads logits: column index col = head*N + neighbor
    #   L[i, col]     = e_l[i, head(col)]
    #   r_row[0, col] = e_r[node(col), head(col)]
    L = jnp.dot(e_l, sel_head, preferred_element_type=jnp.float32)      # (N, 128)
    M1 = jnp.dot(e_r, sel_head, preferred_element_type=jnp.float32)     # (N, 128)
    r_row = jnp.sum(M1 * sel_node, axis=0, keepdims=True)               # (1, 128)
    raw = L + r_row
    act = jnp.where(raw > 0, raw, NEG_SLOPE * raw)                      # LeakyReLU(0.2)

    # adjacency mask computed once, spread across heads with one matmul
    bias = jnp.where(adj > 0, 0.0, -1e9)                                # (N, N)
    act = act + jnp.dot(bias, sel_node, preferred_element_type=jnp.float32)

    # masked softmax per (row, head) group; the per-row global max is a valid
    # constant shift within every head group (softmax is shift-invariant).
    m = jnp.max(act, axis=1, keepdims=True)                             # (N, 1)
    p = jnp.exp(act - m)                                                # (N, 128)
    denom = jnp.dot(p, redh_ref[...], preferred_element_type=jnp.float32)  # (N, heads)
    inv = pl.reciprocal(denom, approx=True)                             # EUP
    alpha = p * jnp.dot(inv, sel_head, preferred_element_type=jnp.float32)

    # single aggregation matmul against block-diagonal Wh:
    #   bwh[h*N + j, h*d + c] = wh[j, h*d + c]; zero elsewhere
    bwh = jnp.dot(sdup_ref[...], wh, preferred_element_type=jnp.float32) * bmask_ref[...]
    feat = jnp.dot(alpha, bwh, preferred_element_type=jnp.float32)      # (N, H)

    # F.normalize(p=2, dim=1) via rsqrt (EUP)
    ss = jnp.sum(feat * feat, axis=1, keepdims=True)
    o_ref[...] = feat * lax.rsqrt(ss + 1e-24)


def gat_normalize_batched(x_b, adj_b, w_gat, a_lr,
                          sel_head, sel_node, red_head, s_dup, blockmask):
    """x_b: (B, N, F_in), adj_b: (B, N, N) -> (B, N, H).  One pallas_call."""
    B = x_b.shape[0]

    def resident(arr):  # weights / selector constants: same block every step
        return pl.BlockSpec(arr.shape, lambda b, _nd=arr.ndim: (0,) * _nd)

    return pl.pallas_call(
        gat_kernel,
        out_shape=jax.ShapeDtypeStruct((B, N_NODES, HIDDEN_DIM), jnp.float32),
        grid=(B,),
        in_specs=[
            pl.BlockSpec((None, N_NODES, INPUT_DIM), lambda b: (b, 0, 0)),
            pl.BlockSpec((None, N_NODES, N_NODES), lambda b: (b, 0, 0)),
            resident(w_gat), resident(a_lr), resident(sel_head),
            resident(sel_node), resident(red_head), resident(s_dup),
            resident(blockmask),
        ],
        out_specs=pl.BlockSpec((None, N_NODES, HIDDEN_DIM), lambda b: (b, 0, 0)),
        compiler_params=pltpu.CompilerParams(
            dimension_semantics=("parallel",)),   # graph i on TC0, graph j on TC1 (v7x)
    )(x_b, adj_b, w_gat, a_lr, sel_head, sel_node, red_head, s_dup, blockmask)


# ---------------- constant selector matrices (trace-time) ---------------------
def make_constants():
    col = jnp.arange(LANES)
    head_of_col = col // N_NODES
    node_of_col = col % N_NODES
    sel_head = (head_of_col[None, :] == jnp.arange(NUM_HEADS)[:, None]).astype(jnp.float32)  # (8,128)
    sel_node = (node_of_col[None, :] == jnp.arange(N_NODES)[:, None]).astype(jnp.float32)    # (16,128)
    red_head = sel_head.T                                                                    # (128,8)
    s_dup = sel_node.T                                                                       # (128,16)
    feat_idx = jnp.arange(HIDDEN_DIM)
    blockmask = (head_of_col[:, None] == (feat_idx[None, :] // HEAD_DIM)).astype(jnp.float32)  # (128,32)
    return sel_head, sel_node, red_head, s_dup, blockmask


# ---------------- parameters (deterministic) ----------------------------------
def make_params(key):
    k = jax.random.split(key, 4)
    # GAT projection weight, stored as (F_in, H) == torch fc.weight.T
    w_gat = 0.1 * jax.random.normal(k[0], (INPUT_DIM, HIDDEN_DIM), jnp.float32)
    # per-head attention vectors a_l, a_r (heads, head_dim), laid out as
    # block-diagonal (H, heads) selectors so e = Wh @ sel gives per-head dots;
    # concatenated into one (H, 2*heads) matrix for a single fused projection.
    a_l = 0.1 * jax.random.normal(k[1], (NUM_HEADS, HEAD_DIM), jnp.float32)
    a_r = 0.1 * jax.random.normal(k[2], (NUM_HEADS, HEAD_DIM), jnp.float32)
    rows = jnp.arange(HIDDEN_DIM)
    head_of_row = rows // HEAD_DIM
    dim_of_row = rows % HEAD_DIM
    heads = jnp.arange(NUM_HEADS)
    al_mat = jnp.where(head_of_row[:, None] == heads[None, :],
                       a_l[head_of_row, dim_of_row][:, None], 0.0)
    ar_mat = jnp.where(head_of_row[:, None] == heads[None, :],
                       a_r[head_of_row, dim_of_row][:, None], 0.0)
    a_lr = jnp.concatenate([al_mat, ar_mat], axis=1).astype(jnp.float32)  # (H, 2*heads)
    # self.out : Linear(2*H, out_dim); stored as (2H, out_dim) == weight.T
    w_out = 0.1 * jax.random.normal(k[3], (2 * HIDDEN_DIM, OUT_DIM), jnp.float32)
    b_out = jnp.zeros((OUT_DIM,), jnp.float32)
    return w_gat, a_lr, w_out, b_out, make_constants()


# ---------------- fixed-shape, jit-safe torch.unique(return_inverse=True) -----
def unique_inverse(ids):
    sorted_ids = jnp.sort(ids)
    is_new = jnp.concatenate(
        [jnp.ones((1,), jnp.int32), (sorted_ids[1:] != sorted_ids[:-1]).astype(jnp.int32)])
    rank = jnp.cumsum(is_new) - 1                       # rank of each sorted position
    pos = jnp.searchsorted(sorted_ids, ids)             # first occurrence (sorted)
    return rank[pos]                                    # == torch inverse indices


# ---------------- full forward -------------------------------------------------
@jax.jit
def static_gat_forward(h_init, feats_i, adj_i, ids_i, feats_j, adj_j, ids_j, params):
    del h_init  # unused in the reference forward
    w_gat, a_lr, w_out, b_out, consts = params

    # both graphs in one fused pallas_call
    x_b = jnp.stack([feats_i, feats_j])                 # (2, N, F_in)
    adj_b = jnp.stack([adj_i, adj_j])                   # (2, N, N)
    sage = gat_normalize_batched(x_b, adj_b, w_gat, a_lr, *consts)   # (2, N, H)
    sage_o_i, sage_o_j = sage[0], sage[1]

    # torch.unique(..., return_inverse=True); rows of sage_o correspond to the
    # sorted-unique dst-node set (DGL block convention), as in the reference.
    idx_i = unique_inverse(ids_i)
    idx_j = unique_inverse(ids_j)
    zi = jnp.take(sage_o_i, idx_i, axis=0)              # (NUM_IDS, H)
    zj = jnp.take(sage_o_j, idx_j, axis=0)              # (NUM_IDS, H)

    # self.out(cat(zi, zj, -1)) with the concat fused away (plain XLA: tiny op)
    h_cur = zi @ w_out[:HIDDEN_DIM] + zj @ w_out[HIDDEN_DIM:] + b_out  # (NUM_IDS, 1)
    h_cur = jnp.squeeze(h_cur, axis=-1)                 # .squeeze(-1), out_dim==1
    return jnp.stack([h_cur])                           # torch.stack(res) -> (1, NUM_IDS)


if __name__ == "__main__":
    key = jax.random.PRNGKey(0)
    kp, kxi, kxj, kai, kaj, kii, kij = jax.random.split(key, 7)

    params = make_params(kp)

    feats_i = jax.random.normal(kxi, (N_NODES, INPUT_DIM), jnp.float32)
    feats_j = jax.random.normal(kxj, (N_NODES, INPUT_DIM), jnp.float32)

    # random sparse-ish adjacency + self-loops (avoid fully-masked softmax rows)
    adj_i = (jax.random.uniform(kai, (N_NODES, N_NODES)) < 0.3).astype(jnp.float32)
    adj_j = (jax.random.uniform(kaj, (N_NODES, N_NODES)) < 0.3).astype(jnp.float32)
    eye = jnp.eye(N_NODES, dtype=jnp.float32)
    adj_i = jnp.maximum(adj_i, eye)
    adj_j = jnp.maximum(adj_j, eye)

    # node-id lists (data_list_*[t][1]) with repeats, values < N_NODES
    ids_i = jax.random.randint(kii, (NUM_IDS,), 0, N_NODES)
    ids_j = jax.random.randint(kij, (NUM_IDS,), 0, N_NODES)

    h_init = jnp.zeros((N_NODES, HIDDEN_DIM), jnp.float32)  # unused (as in torch)

    out = static_gat_forward(h_init, feats_i, adj_i, ids_i,
                             feats_j, adj_j, ids_j, params)
    out = jax.block_until_ready(out)
    assert out.shape == (1, NUM_IDS), out.shape
    assert bool(jnp.all(jnp.isfinite(out)))
    print("KERNEL_OK")
</pallas_src>

<mosaic_0001>
module attributes {stable_mosaic.version = 11 : i64} {
  func.func @gat_kernel(%arg0: i32, %arg1: memref<1x16x32xf32, #tpu.memory_space<vmem>>, %arg2: memref<1x16x16xf32, #tpu.memory_space<vmem>>, %arg3: memref<32x32xf32, #tpu.memory_space<vmem>>, %arg4: memref<32x16xf32, #tpu.memory_space<vmem>>, %arg5: memref<8x128xf32, #tpu.memory_space<vmem>>, %arg6: memref<16x128xf32, #tpu.memory_space<vmem>>, %arg7: memref<128x8xf32, #tpu.memory_space<vmem>>, %arg8: memref<128x16xf32, #tpu.memory_space<vmem>>, %arg9: memref<128x32xf32, #tpu.memory_space<vmem>>, %arg10: memref<1x16x32xf32, #tpu.memory_space<vmem>>) attributes {dimension_semantics = [#tpu.dimension_semantics<parallel>], iteration_bounds = array<i64: 2>, scalar_prefetch = 0 : i64, scratch_operands = 0 : i64, tpu.core_type = #tpu.core_type<tc>, window_params = [{transform_indices = @transform_0, window_bounds = array<i64: 1, 16, 32>}, {transform_indices = @transform_1, window_bounds = array<i64: 1, 16, 16>}, {pipeline_mode = #tpu.pipeline_mode<synchronous>, transform_indices = @transform_2, window_bounds = array<i64: 32, 32>}, {pipeline_mode = #tpu.pipeline_mode<synchronous>, transform_indices = @transform_3, window_bounds = array<i64: 32, 16>}, {pipeline_mode = #tpu.pipeline_mode<synchronous>, transform_indices = @transform_4, window_bounds = array<i64: 8, 128>}, {pipeline_mode = #tpu.pipeline_mode<synchronous>, transform_indices = @transform_5, window_bounds = array<i64: 16, 128>}, {pipeline_mode = #tpu.pipeline_mode<synchronous>, transform_indices = @transform_6, window_bounds = array<i64: 128, 8>}, {pipeline_mode = #tpu.pipeline_mode<synchronous>, transform_indices = @transform_7, window_bounds = array<i64: 128, 16>}, {pipeline_mode = #tpu.pipeline_mode<synchronous>, transform_indices = @transform_8, window_bounds = array<i64: 128, 32>}, {transform_indices = @transform_9, window_bounds = array<i64: 1, 16, 32>}]} {
    %c0 = arith.constant 0 : index
    %c0_0 = arith.constant 0 : index
    %c0_1 = arith.constant 0 : index
    %0 = vector.load %arg1[%c0, %c0_0, %c0_1] : memref<1x16x32xf32, #tpu.memory_space<vmem>>, vector<1x16x32xf32>
    %1 = vector.shape_cast %0 : vector<1x16x32xf32> to vector<16x32xf32>
    %c0_2 = arith.constant 0 : index
    %c0_3 = arith.constant 0 : index
    %c0_4 = arith.constant 0 : index
    %2 = vector.load %arg2[%c0_2, %c0_3, %c0_4] : memref<1x16x16xf32, #tpu.memory_space<vmem>>, vector<1x16x16xf32>
    %3 = vector.shape_cast %2 : vector<1x16x16xf32> to vector<16x16xf32>
    %c0_5 = arith.constant 0 : index
    %c0_6 = arith.constant 0 : index
    %4 = vector.load %arg3[%c0_5, %c0_6] : memref<32x32xf32, #tpu.memory_space<vmem>>, vector<32x32xf32>
    %cst = arith.constant dense<0.000000e+00> : vector<16x32xf32>
    %5 = tpu.matmul %1, %4, %cst {dimension_numbers = #tpu.dot_dimension_numbers<[1], [0], [0], [1], [0, 0, 1, 1], [], []>} : vector<16x32xf32>, vector<32x32xf32>, vector<16x32xf32> -> vector<16x32xf32>
    %c0_7 = arith.constant 0 : index
    %c0_8 = arith.constant 0 : index
    %6 = vector.load %arg4[%c0_7, %c0_8] : memref<32x16xf32, #tpu.memory_space<vmem>>, vector<32x16xf32>
    %cst_9 = arith.constant dense<0.000000e+00> : vector<16x16xf32>
    %7 = tpu.matmul %5, %6, %cst_9 {dimension_numbers = #tpu.dot_dimension_numbers<[1], [0], [0], [1], [0, 0, 1, 1], [], []>} : vector<16x32xf32>, vector<32x16xf32>, vector<16x16xf32> -> vector<16x16xf32>
    %8 = vector.extract_strided_slice %7 {offsets = [0, 0], sizes = [16, 8], strides = [1, 1]} : vector<16x16xf32> to vector<16x8xf32>
    %9 = vector.extract_strided_slice %7 {offsets = [0, 8], sizes = [16, 8], strides = [1, 1]} : vector<16x16xf32> to vector<16x8xf32>
    %c0_10 = arith.constant 0 : index
    %c0_11 = arith.constant 0 : index
    %10 = vector.load %arg5[%c0_10, %c0_11] : memref<8x128xf32, #tpu.memory_space<vmem>>, vector<8x128xf32>
    %c0_12 = arith.constant 0 : index
    %c0_13 = arith.constant 0 : index
    %11 = vector.load %arg6[%c0_12, %c0_13] : memref<16x128xf32, #tpu.memory_space<vmem>>, vector<16x128xf32>
    %cst_14 = arith.constant dense<0.000000e+00> : vector<16x128xf32>
    %12 = tpu.matmul %8, %10, %cst_14 {dimension_numbers = #tpu.dot_dimension_numbers<[1], [0], [0], [1], [0, 0, 1, 1], [], []>} : vector<16x8xf32>, vector<8x128xf32>, vector<16x128xf32> -> vector<16x128xf32>
    %cst_15 = arith.constant dense<0.000000e+00> : vector<16x128xf32>
    %13 = tpu.matmul %9, %10, %cst_15 {dimension_numbers = #tpu.dot_dimension_numbers<[1], [0], [0], [1], [0, 0, 1, 1], [], []>} : vector<16x8xf32>, vector<8x128xf32>, vector<16x128xf32> -> vector<16x128xf32>
    %14 = arith.mulf %13, %11 : vector<16x128xf32>
    %cst_16 = arith.constant dense<0.000000e+00> : vector<128xf32>
    %15 = vector.multi_reduction <add>, %14, %cst_16 [0] : vector<16x128xf32> to vector<128xf32>
    %16 = vector.shape_cast %15 : vector<128xf32> to vector<1x128xf32>
    %17 = vector.broadcast %16 : vector<1x128xf32> to vector<16x128xf32>
    %18 = arith.addf %12, %17 : vector<16x128xf32>
    %cst_17 = arith.constant 0.000000e+00 : f32
    %19 = vector.broadcast %cst_17 : f32 to vector<16x128xf32>
    %20 = arith.cmpf ogt, %18, %19 : vector<16x128xf32>
    %cst_18 = arith.constant 2.000000e-01 : f32
    %21 = vector.broadcast %cst_18 : f32 to vector<16x128xf32>
    %22 = arith.mulf %21, %18 : vector<16x128xf32>
    %23 = arith.select %20, %18, %22 : vector<16x128xi1>, vector<16x128xf32>
    %cst_19 = arith.constant 0.000000e+00 : f32
    %24 = vector.broadcast %cst_19 : f32 to vector<16x16xf32>
    %25 = arith.cmpf ogt, %3, %24 : vector<16x16xf32>
    %cst_20 = arith.constant 0.000000e+00 : f32
    %cst_21 = arith.constant -1.000000e+09 : f32
    %26 = vector.broadcast %cst_20 : f32 to vector<16x16xf32>
    %27 = vector.broadcast %cst_21 : f32 to vector<16x16xf32>
    %28 = arith.select %25, %26, %27 : vector<16x16xi1>, vector<16x16xf32>
    %cst_22 = arith.constant dense<0.000000e+00> : vector<16x128xf32>
    %29 = tpu.matmul %28, %11, %cst_22 {dimension_numbers = #tpu.dot_dimension_numbers<[1], [0], [0], [1], [0, 0, 1, 1], [], []>} : vector<16x16xf32>, vector<16x128xf32>, vector<16x128xf32> -> vector<16x128xf32>
    %30 = arith.addf %23, %29 : vector<16x128xf32>
    %cst_23 = arith.constant dense<0xFF800000> : vector<16xf32>
    %31 = vector.multi_reduction <maximumf>, %30, %cst_23 [1] : vector<16x128xf32> to vector<16xf32>
    %32 = vector.shape_cast %31 : vector<16xf32> to vector<16x1xf32>
    %33 = vector.broadcast %32 : vector<16x1xf32> to vector<16x128xf32>
    %34 = arith.subf %30, %33 : vector<16x128xf32>
    %35 = math.exp %34 : vector<16x128xf32>
    %c0_24 = arith.constant 0 : index
    %c0_25 = arith.constant 0 : index
    %36 = vector.load %arg7[%c0_24, %c0_25] : memref<128x8xf32, #tpu.memory_space<vmem>>, vector<128x8xf32>
    %cst_26 = arith.constant dense<0.000000e+00> : vector<16x8xf32>
    %37 = tpu.matmul %35, %36, %cst_26 {dimension_numbers = #tpu.dot_dimension_numbers<[1], [0], [0], [1], [0, 0, 1, 1], [], []>} : vector<16x128xf32>, vector<128x8xf32>, vector<16x8xf32> -> vector<16x8xf32>
    %38 = tpu.reciprocal %37 {approx = true} : vector<16x8xf32> -> vector<16x8xf32>
    %cst_27 = arith.constant dense<0.000000e+00> : vector<16x128xf32>
    %39 = tpu.matmul %38, %10, %cst_27 {dimension_numbers = #tpu.dot_dimension_numbers<[1], [0], [0], [1], [0, 0, 1, 1], [], []>} : vector<16x8xf32>, vector<8x128xf32>, vector<16x128xf32> -> vector<16x128xf32>
    %40 = arith.mulf %35, %39 : vector<16x128xf32>
    %c0_28 = arith.constant 0 : index
    %c0_29 = arith.constant 0 : index
    %41 = vector.load %arg8[%c0_28, %c0_29] : memref<128x16xf32, #tpu.memory_space<vmem>>, vector<128x16xf32>
    %cst_30 = arith.constant dense<0.000000e+00> : vector<128x32xf32>
    %42 = tpu.matmul %41, %5, %cst_30 {dimension_numbers = #tpu.dot_dimension_numbers<[1], [0], [0], [1], [0, 0, 1, 1], [], []>} : vector<128x16xf32>, vector<16x32xf32>, vector<128x32xf32> -> vector<128x32xf32>
    %c0_31 = arith.constant 0 : index
    %c0_32 = arith.constant 0 : index
    %43 = vector.load %arg9[%c0_31, %c0_32] : memref<128x32xf32, #tpu.memory_space<vmem>>, vector<128x32xf32>
    %44 = arith.mulf %42, %43 : vector<128x32xf32>
    %cst_33 = arith.constant dense<0.000000e+00> : vector<16x32xf32>
    %45 = tpu.matmul %40, %44, %cst_33 {dimension_numbers = #tpu.dot_dimension_numbers<[1], [0], [0], [1], [0, 0, 1, 1], [], []>} : vector<16x128xf32>, vector<128x32xf32>, vector<16x32xf32> -> vector<16x32xf32>
    %46 = arith.mulf %45, %45 : vector<16x32xf32>
    %cst_34 = arith.constant dense<0.000000e+00> : vector<16xf32>
    %47 = vector.multi_reduction <add>, %46, %cst_34 [1] : vector<16x32xf32> to vector<16xf32>
    %48 = vector.shape_cast %47 : vector<16xf32> to vector<16x1xf32>
    %cst_35 = arith.constant 1.000000e-24 : f32
    %49 = vector.broadcast %cst_35 : f32 to vector<16x1xf32>
    %50 = arith.addf %48, %49 : vector<16x1xf32>
    %51 = math.rsqrt %50 : vector<16x1xf32>
    %52 = vector.broadcast %51 : vector<16x1xf32> to vector<16x32xf32>
    %53 = arith.mulf %45, %52 : vector<16x32xf32>
    %c0_36 = arith.constant 0 : index
    %c0_37 = arith.constant 0 : index
    %c0_38 = arith.constant 0 : index
    %54 = vector.load %arg10[%c0_36, %c0_37, %c0_38] : memref<1x16x32xf32, #tpu.memory_space<vmem>>, vector<1x16x32xf32>
    %55 = vector.shape_cast %54 : vector<1x16x32xf32> to vector<16x32xf32>
    %56 = vector.shape_cast %53 : vector<16x32xf32> to vector<1x16x32xf32>
    tpu.vector_store %arg10[%c0_36, %c0_37, %c0_38], %56 {strides = array<i32>} : memref<1x16x32xf32, #tpu.memory_space<vmem>>, vector<1x16x32xf32>,
    return
  }
  func.func @transform_0(%arg0: i32) -> (i32, i32, i32) {
    %c0_i32 = arith.constant 0 : i32
    %c0_i32_0 = arith.constant 0 : i32
    %c0_i32_1 = arith.constant 0 : i32
    return %arg0, %c0_i32, %c0_i32_0 : i32, i32, i32
  }
  func.func @transform_1(%arg0: i32) -> (i32, i32, i32) {
    %c0_i32 = arith.constant 0 : i32
    %c0_i32_0 = arith.constant 0 : i32
    %c0_i32_1 = arith.constant 0 : i32
    return %arg0, %c0_i32, %c0_i32_0 : i32, i32, i32
  }
  func.func @transform_2(%arg0: i32) -> (i32, i32) {
    %c0_i32 = arith.constant 0 : i32
    %c0_i32_0 = arith.constant 0 : i32
    %c0_i32_1 = arith.constant 0 : i32
    return %c0_i32, %c0_i32_0 : i32, i32
  }
  func.func @transform_3(%arg0: i32) -> (i32, i32) {
    %c0_i32 = arith.constant 0 : i32
    %c0_i32_0 = arith.constant 0 : i32
    %c0_i32_1 = arith.constant 0 : i32
    return %c0_i32, %c0_i32_0 : i32, i32
  }
  func.func @transform_4(%arg0: i32) -> (i32, i32) {
    %c0_i32 = arith.constant 0 : i32
    %c0_i32_0 = arith.constant 0 : i32
    %c0_i32_1 = arith.constant 0 : i32
    return %c0_i32, %c0_i32_0 : i32, i32
  }
  func.func @transform_5(%arg0: i32) -> (i32, i32) {
    %c0_i32 = arith.constant 0 : i32
    %c0_i32_0 = arith.constant 0 : i32
    %c0_i32_1 = arith.constant 0 : i32
    return %c0_i32, %c0_i32_0 : i32, i32
  }
  func.func @transform_6(%arg0: i32) -> (i32, i32) {
    %c0_i32 = arith.constant 0 : i32
    %c0_i32_0 = arith.constant 0 : i32
    %c0_i32_1 = arith.constant 0 : i32
    return %c0_i32, %c0_i32_0 : i32, i32
  }
  func.func @transform_7(%arg0: i32) -> (i32, i32) {
    %c0_i32 = arith.constant 0 : i32
    %c0_i32_0 = arith.constant 0 : i32
    %c0_i32_1 = arith.constant 0 : i32
    return %c0_i32, %c0_i32_0 : i32, i32
  }
  func.func @transform_8(%arg0: i32) -> (i32, i32) {
    %c0_i32 = arith.constant 0 : i32
    %c0_i32_0 = arith.constant 0 : i32
    %c0_i32_1 = arith.constant 0 : i32
    return %c0_i32, %c0_i32_0 : i32, i32
  }
  func.func @transform_9(%arg0: i32) -> (i32, i32, i32) {
    %c0_i32 = arith.constant 0 : i32
    %c0_i32_0 = arith.constant 0 : i32
    %c0_i32_1 = arith.constant 0 : i32
    return %arg0, %c0_i32, %c0_i32_0 : i32, i32, i32
  }
}

</mosaic_0001>

<llo_original>
// kernel: custom-call
$region0: #{custom-call}
  %s0 = inlined_call_operand.vmem [shape: u32[8], index: 0, kind: output, shape index: {}]

// kernel: static_gat_forward.1
$region0: #{static_gat_forward.1}
  #allocation0 [shape = 'u32[]', space=smem, size = 0x4, offset = 0x4, fixed_abs, tag = 'smem constant byte address 0x4 - core index']
  #allocation1 [shape = 'u32[144,128]{1,0:T(1,128)}', space=vmem, size = 0x12000, scoped, tag = 'internal scratch']
  %s0 = inlined_call_operand.vmem [shape: f32[2,16,32], index: 0, kind: input, shape index: {}]
  %s1 = inlined_call_operand.vmem [shape: f32[2,16,16], index: 1, kind: input, shape index: {}]
  %s2 = inlined_call_operand.vmem [shape: f32[32,32], index: 2, kind: input, shape index: {}]
  %s3 = inlined_call_operand.vmem [shape: f32[32,16], index: 3, kind: input, shape index: {}]
  %s4 = inlined_call_operand.vmem [shape: f32[8,128], index: 4, kind: input, shape index: {}]
  %s5 = inlined_call_operand.vmem [shape: f32[16,128], index: 5, kind: input, shape index: {}]
  %s6 = inlined_call_operand.vmem [shape: f32[128,8], index: 6, kind: input, shape index: {}]
  %s7 = inlined_call_operand.vmem [shape: f32[128,16], index: 7, kind: input, shape index: {}]
  %s8 = inlined_call_operand.vmem [shape: f32[128,32], index: 8, kind: input, shape index: {}]
  %s9 = inlined_call_operand.vmem [shape: f32[2,16,32], index: 9, kind: output, shape index: {}]
  %s10 = sld [smem:[#allocation0]]
  $region69: #{static_gat_forward.1} parent=0
    _
  %s12 = ssub.s32 1, %s10
  %s13 = scalar_select 0, %s12, %s10
  loop: start=0, step=1, limit=4
  $region2: #{static_gat_forward.1} parent=0 // loop_pre_header
    _
  $region3: #{static_gat_forward.1} parent=0 // loop_header
    %s15 = sphi 0, %s19
    %p16 = scmp.ge.s32.totalorder %s15, 4
    %s25 = sphi 0, %s27
    %s28 = sphi 0, %s25
    %s29 = sphi 0, %s28
    %s45 = sphi 0, %s29
    %s51 = sphi 0, %s53
    %s54 = sphi 0, %s51
    %s55 = sphi 0, %s54
    %s71 = sphi 0, %s55
    %s75 = sphi 0, %s75
    %s77 = sphi 0, %s75
    %s78 = sphi 0, %s77
    %s92 = sphi 0, %s78
    %s96 = sphi 0, %s96
    %s98 = sphi 0, %s96
    %s99 = sphi 0, %s98
    %s113 = sphi 0, %s99
    %s117 = sphi 0, %s117
    %s119 = sphi 0, %s117
    %s120 = sphi 0, %s119
    %s134 = sphi 0, %s120
    %s138 = sphi 0, %s138
    %s140 = sphi 0, %s138
    %s141 = sphi 0, %s140
    %s155 = sphi 0, %s141
    %s159 = sphi 0, %s159
    %s161 = sphi 0, %s159
    %s162 = sphi 0, %s161
    %s176 = sphi 0, %s162
    %s180 = sphi 0, %s180
    %s182 = sphi 0, %s180
    %s183 = sphi 0, %s182
    %s197 = sphi 0, %s183
    %s201 = sphi 0, %s201
    %s203 = sphi 0, %s201
    %s204 = sphi 0, %s203
    %s218 = sphi 0, %s204
    %s224 = sphi 0, %s226
    %s227 = sphi 0, %s224
    %s228 = sphi 0, %s227
    %s244 = sphi 0, %s228
  $region4: #{static_gat_forward.1} parent=0 // loop_header_branch
    %18 = sbr.rel (%p16) target = $region8
  $region5: #{static_gat_forward.1} parent=0 // loop_body
    %s20 = ssub.s32 %s15, 1
    %s21 = ssub.s32 %s15, 2
    %s22 = sadd.s32 %s15, 1
    %s23 = ssub.s32 %s15, %s22
    %p24 = scmp.eq.s32.totalorder %s23, 0
    %s26 = sadd.s32 %s25, 1
    %s27 = scalar_select %p24, %s25, %s26
    %p30 = pneg %p24
    %p31 = scmp.eq.s32.totalorder %s15, 1
    %p32 = por %p30, %p31
    %p33 = scmp.ne.s32.totalorder %s25, %s28
    %p34 = scmp.eq.s32.totalorder %s15, 0
    %p35 = por %p33, %p34
    %p36 = scmp.ne.s32.totalorder %s25, %s28
    %p37 = scmp.eq.s32.totalorder %s20, 1
    %p38 = por %p36, %p37
    %p39 = scmp.ne.s32.totalorder %s28, %s29
    %p40 = scmp.eq.s32.totalorder %s20, 0
    %p41 = por %p39, %p40
    %p42 = scmp.ne.s32.totalorder %s28, %s29
    %p43 = scmp.eq.s32.totalorder %s21, 1
    %p44 = por %p42, %p43
    %p46 = scmp.ne.s32.totalorder %s29, %s45
    %p47 = scmp.eq.s32.totalorder %s21, 0
    %p48 = por %p46, %p47
    %s49 = ssub.s32 %s15, %s22
    %p50 = scmp.eq.s32.totalorder %s49, 0
    %s52 = sadd.s32 %s51, 1
    %s53 = scalar_select %p50, %s51, %s52
    %p56 = pneg %p50
    %p57 = scmp.eq.s32.totalorder %s15, 1
    %p58 = por %p56, %p57
    %p59 = scmp.ne.s32.totalorder %s51, %s54
    %p60 = scmp.eq.s32.totalorder %s15, 0
    %p61 = por %p59, %p60
    %p62 = scmp.ne.s32.totalorder %s51, %s54
    %p63 = scmp.eq.s32.totalorder %s20, 1
    %p64 = por %p62, %p63
    %p65 = scmp.ne.s32.totalorder %s54, %s55
    %p66 = scmp.eq.s32.totalorder %s20, 0
    %p67 = por %p65, %p66
    %p68 = scmp.ne.s32.totalorder %s54, %s55
    %p69 = scmp.eq.s32.totalorder %s21, 1
    %p70 = por %p68, %p69
    %p72 = scmp.ne.s32.totalorder %s55, %s71
    %p73 = scmp.eq.s32.totalorder %s21, 0
    %p74 = por %p72, %p73
    %s76 = sadd.s32 %s75, 1
    %p79 = scmp.eq.s32.totalorder %s15, 1
    %p80 = scmp.ne.s32.totalorder %s75, %s77
    %p81 = scmp.eq.s32.totalorder %s15, 0
    %p82 = por %p80, %p81
    %p83 = scmp.ne.s32.totalorder %s75, %s77
    %p84 = scmp.eq.s32.totalorder %s20, 1
    %p85 = por %p83, %p84
    %p86 = scmp.ne.s32.totalorder %s77, %s78
    %p87 = scmp.eq.s32.totalorder %s20, 0
    %p88 = por %p86, %p87
    %p89 = scmp.ne.s32.totalorder %s77, %s78
    %p90 = scmp.eq.s32.totalorder %s21, 1
    %p91 = por %p89, %p90
    %p93 = scmp.ne.s32.totalorder %s78, %s92
    %p94 = scmp.eq.s32.totalorder %s21, 0
    %p95 = por %p93, %p94
    %s97 = sadd.s32 %s96, 1
    %p100 = scmp.eq.s32.totalorder %s15, 1
    %p101 = scmp.ne.s32.totalorder %s96, %s98
    %p102 = scmp.eq.s32.totalorder %s15, 0
    %p103 = por %p101, %p102
    %p104 = scmp.ne.s32.totalorder %s96, %s98
    %p105 = scmp.eq.s32.totalorder %s20, 1
    %p106 = por %p104, %p105
    %p107 = scmp.ne.s32.totalorder %s98, %s99
    %p108 = scmp.eq.s32.totalorder %s20, 0
    %p109 = por %p107, %p108
    %p110 = scmp.ne.s32.totalorder %s98, %s99
    %p111 = scmp.eq.s32.totalorder %s21, 1
    %p112 = por %p110, %p111
    %p114 = scmp.ne.s32.totalorder %s99, %s113
    %p115 = scmp.eq.s32.totalorder %s21, 0
    %p116 = por %p114, %p115
    %s118 = sadd.s32 %s117, 1
    %p121 = scmp.eq.s32.totalorder %s15, 1
    %p122 = scmp.ne.s32.totalorder %s117, %s119
    %p123 = scmp.eq.s32.totalorder %s15, 0
    %p124 = por %p122, %p123
    %p125 = scmp.ne.s32.totalorder %s117, %s119
    %p126 = scmp.eq.s32.totalorder %s20, 1
    %p127 = por %p125, %p126
    %p128 = scmp.ne.s32.totalorder %s119, %s120
    %p129 = scmp.eq.s32.totalorder %s20, 0
    %p130 = por %p128, %p129
    %p131 = scmp.ne.s32.totalorder %s119, %s120
    %p132 = scmp.eq.s32.totalorder %s21, 1
    %p133 = por %p131, %p132
    %p135 = scmp.ne.s32.totalorder %s120, %s134
    %p136 = scmp.eq.s32.totalorder %s21, 0
    %p137 = por %p135, %p136
    %s139 = sadd.s32 %s138, 1
    %p142 = scmp.eq.s32.totalorder %s15, 1
    %p143 = scmp.ne.s32.totalorder %s138, %s140
    %p144 = scmp.eq.s32.totalorder %s15, 0
    %p145 = por %p143, %p144
    %p146 = scmp.ne.s32.totalorder %s138, %s140
    %p147 = scmp.eq.s32.totalorder %s20, 1
    %p148 = por %p146, %p147
    %p149 = scmp.ne.s32.totalorder %s140, %s141
    %p150 = scmp.eq.s32.totalorder %s20, 0
    %p151 = por %p149, %p150
    %p152 = scmp.ne.s32.totalorder %s140, %s141
    %p153 = scmp.eq.s32.totalorder %s21, 1
    %p154 = por %p152, %p153
    %p156 = scmp.ne.s32.totalorder %s141, %s155
    %p157 = scmp.eq.s32.totalorder %s21, 0
    %p158 = por %p156, %p157
    %s160 = sadd.s32 %s159, 1
    %p163 = scmp.eq.s32.totalorder %s15, 1
    %p164 = scmp.ne.s32.totalorder %s159, %s161
    %p165 = scmp.eq.s32.totalorder %s15, 0
    %p166 = por %p164, %p165
    %p167 = scmp.ne.s32.totalorder %s159, %s161
    %p168 = scmp.eq.s32.totalorder %s20, 1
    %p169 = por %p167, %p168
    %p170 = scmp.ne.s32.totalorder %s161, %s162
    %p171 = scmp.eq.s32.totalorder %s20, 0
    %p172 = por %p170, %p171
    %p173 = scmp.ne.s32.totalorder %s161, %s162
    %p174 = scmp.eq.s32.totalorder %s21, 1
    %p175 = por %p173, %p174
    %p177 = scmp.ne.s32.totalorder %s162, %s176
    %p178 = scmp.eq.s32.totalorder %s21, 0
    %p179 = por %p177, %p178
    %s181 = sadd.s32 %s180, 1
    %p184 = scmp.eq.s32.totalorder %s15, 1
    %p185 = scmp.ne.s32.totalorder %s180, %s182
    %p186 = scmp.eq.s32.totalorder %s15, 0
    %p187 = por %p185, %p186
    %p188 = scmp.ne.s32.totalorder %s180, %s182
    %p189 = scmp.eq.s32.totalorder %s20, 1
    %p190 = por %p188, %p189
    %p191 = scmp.ne.s32.totalorder %s182, %s183
    %p192 = scmp.eq.s32.totalorder %s20, 0
    %p193 = por %p191, %p192
    %p194 = scmp.ne.s32.totalorder %s182, %s183
    %p195 = scmp.eq.s32.totalorder %s21, 1
    %p196 = por %p194, %p195
    %p198 = scmp.ne.s32.totalorder %s183, %s197
    %p199 = scmp.eq.s32.totalorder %s21, 0
    %p200 = por %p198, %p199
    %s202 = sadd.s32 %s201, 1
    %p205 = scmp.eq.s32.totalorder %s15, 1
    %p206 = scmp.ne.s32.totalorder %s201, %s203
    %p207 = scmp.eq.s32.totalorder %s15, 0
    %p208 = por %p206, %p207
    %p209 = scmp.ne.s32.totalorder %s201, %s203
    %p210 = scmp.eq.s32.totalorder %s20, 1
    %p211 = por %p209, %p210
    %p212 = scmp.ne.s32.totalorder %s203, %s204
    %p213 = scmp.eq.s32.totalorder %s20, 0
    %p214 = por %p212, %p213
    %p215 = scmp.ne.s32.totalorder %s203, %s204
    %p216 = scmp.eq.s32.totalorder %s21, 1
    %p217 = por %p215, %p216
    %p219 = scmp.ne.s32.totalorder %s204, %s218
    %p220 = scmp.eq.s32.totalorder %s21, 0
    %p221 = por %p219, %p220
    %s222 = ssub.s32 %s15, %s22
    %p223 = scmp.eq.s32.totalorder %s222, 0
    %s225 = sadd.s32 %s224, 1
    %s226 = scalar_select %p223, %s224, %s225
    %p229 = pneg %p223
    %p230 = scmp.eq.s32.totalorder %s15, 1
    %p231 = por %p229, %p230
    %p232 = scmp.ne.s32.totalorder %s224, %s227
    %p233 = scmp.eq.s32.totalorder %s15, 0
    %p234 = por %p232, %p233
    %p235 = scmp.ne.s32.totalorder %s224, %s227
    %p236 = scmp.eq.s32.totalorder %s20, 1
    %p237 = por %p235, %p236
    %p238 = scmp.ne.s32.totalorder %s227, %s228
    %p239 = scmp.eq.s32.totalorder %s20, 0
    %p240 = por %p238, %p239
    %p241 = scmp.ne.s32.totalorder %s227, %s228
    %p242 = scmp.eq.s32.totalorder %s21, 1
    %p243 = por %p241, %p242
    %p245 = scmp.ne.s32.totalorder %s228, %s244
    %p246 = scmp.eq.s32.totalorder %s21, 0
    %p247 = por %p245, %p246
    %p248 = scmp.le.s32.totalorder 1, %s15
    %p249 = scmp.lt.s32.totalorder %s15, 3
    %p250 = pnand %p248, %p249
    %p251 = pneg %p250
    // Predicated region
    $region9: #{static_gat_forward.1} parent=5 // pred_check
      _
    $region10: #{static_gat_forward.1} parent=5 // pred_check_branch
      %253 = sbr.rel (%p250) target = $region12
    $region11: #{static_gat_forward.1} parent=5 // pred_region
      %s254 = ssub.s32 %s15, 1
      // Predicated region
      $region13: #{static_gat_forward.1} parent=11 // pred_check
        %p255 = pneg %p88
      $region14: #{static_gat_forward.1} parent=11 // pred_check_branch
        %257 = sbr.rel (%p255) target = $region16
      $region15: #{static_gat_forward.1} parent=11 // pred_region
        _
      $region16: #{static_gat_forward.1} parent=11 // pred_fallthru
        _
      // Predicated region
      $region17: #{static_gat_forward.1} parent=11 // pred_check
        %p258 = pneg %p109
      $region18: #{static_gat_forward.1} parent=11 // pred_check_branch
        %260 = sbr.rel (%p258) target = $region20
      $region19: #{static_gat_forward.1} parent=11 // pred_region
        _
      $region20: #{static_gat_forward.1} parent=11 // pred_fallthru
        _
      // Predicated region
      $region21: #{static_gat_forward.1} parent=11 // pred_check
        %p261 = pneg %p130
      $region22: #{static_gat_forward.1} parent=11 // pred_check_branch
        %263 = sbr.rel (%p261) target = $region24
      $region23: #{static_gat_forward.1} parent=11 // pred_region
        _
      $region24: #{static_gat_forward.1} parent=11 // pred_fallthru
        _
      // Predicated region
      $region25: #{static_gat_forward.1} parent=11 // pred_check
        %p264 = pneg %p151
      $region26: #{static_gat_forward.1} parent=11 // pred_check_branch
        %266 = sbr.rel (%p264) target = $region28
      $region27: #{static_gat_forward.1} parent=11 // pred_region
        _
      $region28: #{static_gat_forward.1} parent=11 // pred_fallthru
        _
      // Predicated region
      $region29: #{static_gat_forward.1} parent=11 // pred_check
        %p267 = pneg %p172
      $region30: #{static_gat_forward.1} parent=11 // pred_check_branch
        %269 = sbr.rel (%p267) target = $region32
      $region31: #{static_gat_forward.1} parent=11 // pred_region
        _
      $region32: #{static_gat_forward.1} parent=11 // pred_fallthru
        _
      // Predicated region
      $region33: #{static_gat_forward.1} parent=11 // pred_check
        %p270 = pneg %p193
      $region34: #{static_gat_forward.1} parent=11 // pred_check_branch
        %272 = sbr.rel (%p270) target = $region36
      $region35: #{static_gat_forward.1} parent=11 // pred_region
        _
      $region36: #{static_gat_forward.1} parent=11 // pred_fallthru
        _
      // Predicated region
      $region37: #{static_gat_forward.1} parent=11 // pred_check
        %p273 = pneg %p214
      $region38: #{static_gat_forward.1} parent=11 // pred_check_branch
        %275 = sbr.rel (%p273) target = $region40
      $region39: #{static_gat_forward.1} parent=11 // pred_region
        _
      $region40: #{static_gat_forward.1} parent=11 // pred_fallthru
        _
    $region12: #{static_gat_forward.1} parent=5 // pred_fallthru
      _
    %p276 = scmp.lt.s32.totalorder %s15, 2
    // Predicated region
    $region41: #{static_gat_forward.1} parent=5 // pred_check
      %p277 = pneg %p276
    $region42: #{static_gat_forward.1} parent=5 // pred_check_branch
      %279 = sbr.rel (%p277) target = $region44
    $region43: #{static_gat_forward.1} parent=5 // pred_region
      // Predicated region
      $region45: #{static_gat_forward.1} parent=43 // pred_check
        %p280 = pneg %p35
      $region46: #{static_gat_forward.1} parent=43 // pred_check_branch
        %282 = sbr.rel (%p280) target = $region48
      $region47: #{static_gat_forward.1} parent=43 // pred_region
        %p283 = scmp.lt.s32.totalorder %s15, 1
        %s284 = scalar_select %p283, %s15, 1
        %s285 = smul.addr %s284, 2
        %s286 = smul.addr %s285, 8
        %s287 = scalar_lea.vmem %s0, %s286
      $region48: #{static_gat_forward.1} parent=43 // pred_fallthru
        _
      // Predicated region
      $region49: #{static_gat_forward.1} parent=43 // pred_check
        %p288 = pneg %p61
      $region50: #{static_gat_forward.1} parent=43 // pred_check_branch
        %290 = sbr.rel (%p288) target = $region52
      $region51: #{static_gat_forward.1} parent=43 // pred_region
        %p291 = scmp.lt.s32.totalorder %s15, 1
        %s292 = scalar_select %p291, %s15, 1
        %s293 = smul.addr %s292, 2
        %s294 = smul.addr %s293, 8
        %s295 = scalar_lea.vmem %s1, %s294
      $region52: #{static_gat_forward.1} parent=43 // pred_fallthru
        _
    $region44: #{static_gat_forward.1} parent=5 // pred_fallthru
      _
    %p296 = scmp.le.s32.totalorder 1, %s15
    %p297 = scmp.lt.s32.totalorder %s15, 3
    %p298 = pnand %p296, %p297
    %p299 = pneg %p298
    // Predicated region
    $region53: #{static_gat_forward.1} parent=5 // pred_check
      _
    $region54: #{static_gat_forward.1} parent=5 // pred_check_branch
      %301 = sbr.rel (%p298) target = $region56
    $region55: #{static_gat_forward.1} parent=5 // pred_region
      %s302 = ssub.s32 %s15, 1
      %p303 = scmp.lt.s32.totalorder %s20, 1
      %s304 = scalar_select %p303, %s20, 1
      %s305 = smul.addr %s304, 2
      %s306 = smul.addr %s305, 8
      %s307 = scalar_lea.vmem %s0, %s306
      %p308 = pneg %p41
      %p309 = pneg %p38
      %p310 = scmp.lt.s32.totalorder %s20, 1
      %s311 = scalar_select %p310, %s20, 1
      %s312 = smul.addr %s311, 2
      %s313 = smul.addr %s312, 8
      %s314 = scalar_lea.vmem %s1, %s313
      %p315 = pneg %p67
      %p316 = pneg %p64
      %p317 = pneg %p88
      %p318 = pneg %p85
      %p319 = pneg %p109
      %p320 = pneg %p106
      %p321 = pneg %p130
      %p322 = pneg %p127
      %p323 = pneg %p151
      %p324 = pneg %p148
      %p325 = pneg %p172
      %p326 = pneg %p169
      %p327 = pneg %p193
      %p328 = pneg %p190
      %p329 = pneg %p214
      %p330 = pneg %p211
      %p331 = pneg %p240
      %p332 = pneg %p237
      %p333 = scmp.lt.s32.totalorder %s20, 1
      %s334 = scalar_select %p333, %s20, 1
      %s335 = smul.addr %s334, 2
      %s336 = smul.addr %s335, 8
      %s337 = scalar_lea.vmem %s9, %s336
      %p338 = scmp.lt.s32.totalorder %s20, 1
      %s339 = scalar_select %p338, %s20, 1
      %s340 = smul.addr %s339, 2
      %s341 = smul.addr %s340, 8
      %s342 = scalar_lea.vmem %s0, %s341
      %p343 = scmp.lt.s32.totalorder %s20, 1
      %s344 = scalar_select %p343, %s20, 1
      %s345 = smul.addr %s344, 2
      %s346 = smul.addr %s345, 8
      %s347 = scalar_lea.vmem %s1, %s346
      %p348 = scmp.lt.s32.totalorder %s20, 1
      %s349 = scalar_select %p348, %s20, 1
      %s350 = smul.addr %s349, 2
      %s351 = smul.addr %s350, 8
      %s352 = scalar_lea.vmem %s9, %s351
      %v353 = vld [vmem:[%s342] sm:$0xff]
      %v354 = vld [vmem:[%s342 + $0x8] sm:$0xff]
      %v355 = vld [vmem:[%s347] sm:$0xff]
      %v356 = vld [vmem:[%s347 + $0x8] sm:$0xff]
      %v357 = vld [vmem:[%s2] sm:$0xff]
      %v358 = vld [vmem:[%s2 + $0x8] sm:$0xff]
      %v359 = vld [vmem:[%s2 + $0x10] sm:$0xff]
      %v360 = vld [vmem:[%s2 + $0x18] sm:$0xff]
      %vm361 = vcmask 261120
      %v363 = vsel %vm361, %v353, 0
      %v366 = vsel %vm361, %v354, 0
      %368 = vmatprep.subr.mxu0 0.0
      %369 = vmatpush1.msra.mxu0 0.0
      %370 = vmatprep.subr.mxu0 0.0
      %371 = vmatpush1.msra.mxu0 0.0
      %372 = vmatprep.subr.mxu0 0.0
      %373 = vmatpush1.msra.mxu0 0.0
      %374 = vmatprep.subr.mxu0 0.0
      %375 = vmatpush1.msra.mxu0 0.0
      %376 = vmatprep.subr.mxu0 0.0
      %377 = vmatpush1.msra.mxu0 0.0
      %378 = vmatprep.subr.mxu0 0.0
      %379 = vmatpush1.msra.mxu0 0.0
      %380 = vmatprep.subr.mxu0 0.0
      %381 = vmatpush1.msra.mxu0 0.0
      %382 = vmatprep.subr.mxu0 0.0
      %383 = vmatpush1.msra.mxu0 0.0
      %384 = vmatprep.subr.mxu0 0.0
      %385 = vmatpush1.msra.mxu0 0.0
      %386 = vmatprep.subr.mxu0 0.0
      %387 = vmatpush1.msra.mxu0 0.0
      %388 = vmatprep.subr.mxu0 0.0
      %389 = vmatpush1.msra.mxu0 0.0
      %390 = vmatprep.subr.mxu0 0.0
      %391 = vmatpush1.msra.mxu0 0.0
      %392 = vmatprep.subr.mxu0 0.0
      %393 = vmatpush1.msra.mxu0 %v360
      %394 = vmatprep.subr.mxu0 0.0
      %395 = vmatpush1.msra.mxu0 %v359
      %396 = vmatprep.subr.mxu0 0.0
      %397 = vmatpush1.msra.mxu0 %v358
      %398 = vmatprep.subr.mxu0 0.0
      %399 = vmatpush1.msra.mxu0 %v357
      %400 = vmatprep.subr.mxu0 0.0
      %401 = vmatpush2.msra.mxu0 0.0
      %402 = vmatprep.subr.mxu0 0.0
      %403 = vmatpush2.msra.mxu0 0.0
      %404 = vmatprep.subr.mxu0 0.0
      %405 = vmatpush2.msra.mxu0 0.0
      %406 = vmatprep.subr.mxu0 0.0
      %407 = vmatpush2.msra.mxu0 0.0
      %408 = vmatprep.subr.mxu0 0.0
      %409 = vmatpush2.msra.mxu0 0.0
      %410 = vmatprep.subr.mxu0 0.0
      %411 = vmatpush2.msra.mxu0 0.0
      %412 = vmatprep.subr.mxu0 0.0
      %413 = vmatpush2.msra.mxu0 0.0
      %414 = vmatprep.subr.mxu0 0.0
      %415 = vmatpush2.msra.mxu0 0.0
      %416 = vmatprep.subr.mxu0 0.0
      %417 = vmatpush2.msra.mxu0 0.0
      %418 = vmatprep.subr.mxu0 0.0
      %419 = vmatpush2.msra.mxu0 0.0
      %420 = vmatprep.subr.mxu0 0.0
      %421 = vmatpush2.msra.mxu0 0.0
      %422 = vmatprep.subr.mxu0 0.0
      %423 = vmatpush2.msra.mxu0 0.0
      %424 = vmatprep.subr.mxu0 0.0
      %425 = vmatpush2.msra.mxu0 0.0
      %426 = vmatprep.subr.mxu0 0.0
      %427 = vmatpush2.msra.mxu0 0.0
      %428 = vmatprep.subr.mxu0 0.0
      %429 = vmatpush2.msra.mxu0 0.0
      %430 = vmatprep.subr.mxu0 0.0
      %431 = vmatpush2.msra.mxu0 0.0
      %432 = vmatprep.mubr.f32.mxu0 0.0
      %433 = vmatmul.mubr.f32.gmra.mxu0 %v363
      %v434 = vpop.f32.mrf.mxu0
      %v435 = vadd.f32 0.0, %v434
      %v436 = vpop.f32.mrf.mxu0
      %437 = vmatprep.mubr.f32.mxu0 0.0
      %438 = vmatmul.mubr.f32.gmra.mxu0 %v366
      %v439 = vpop.f32.mrf.mxu0
      %v440 = vadd.f32 0.0, %v439
      %v441 = vpop.f32.mrf.mxu0
      %442 = vdwg.mxu0
      %v443 = vld [vmem:[%s3] sm:$0xff]
      %v444 = vld [vmem:[%s3 + $0x8] sm:$0xff]
      %v445 = vld [vmem:[%s3 + $0x10] sm:$0xff]
      %v446 = vld [vmem:[%s3 + $0x18] sm:$0xff]
      %v448 = vsel %vm361, %v435, 0
      %v451 = vsel %vm361, %v440, 0
      %453 = vmatprep.subr.mxu0 0.0
      %454 = vmatpush1.msra.mxu0 0.0
      %455 = vmatprep.subr.mxu0 0.0
      %456 = vmatpush1.msra.mxu0 0.0
      %457 = vmatprep.subr.mxu0 0.0
      %458 = vmatpush1.msra.mxu0 0.0
      %459 = vmatprep.subr.mxu0 0.0
      %460 = vmatpush1.msra.mxu0 0.0
      %461 = vmatprep.subr.mxu0 0.0
      %462 = vmatpush1.msra.mxu0 0.0
      %463 = vmatprep.subr.mxu0 0.0
      %464 = vmatpush1.msra.mxu0 0.0
      %465 = vmatprep.subr.mxu0 0.0
      %466 = vmatpush1.msra.mxu0 0.0
      %467 = vmatprep.subr.mxu0 0.0
      %468 = vmatpush1.msra.mxu0 0.0
      %469 = vmatprep.subr.mxu0 0.0
      %470 = vmatpush1.msra.mxu0 0.0
      %471 = vmatprep.subr.mxu0 0.0
      %472 = vmatpush1.msra.mxu0 0.0
      %473 = vmatprep.subr.mxu0 0.0
      %474 = vmatpush1.msra.mxu0 0.0
      %475 = vmatprep.subr.mxu0 0.0
      %476 = vmatpush1.msra.mxu0 0.0
      %477 = vmatprep.subr.mxu0 0.0
      %478 = vmatpush1.msra.mxu0 %v446
      %479 = vmatprep.subr.mxu0 0.0
      %480 = vmatpush1.msra.mxu0 %v445
      %481 = vmatprep.subr.mxu0 0.0
      %482 = vmatpush1.msra.mxu0 %v444
      %483 = vmatprep.subr.mxu0 0.0
      %484 = vmatpush1.msra.mxu0 %v443
      %485 = vmatprep.subr.mxu0 0.0
      %486 = vmatpush2.msra.mxu0 0.0
      %487 = vmatprep.subr.mxu0 0.0
      %488 = vmatpush2.msra.mxu0 0.0
      %489 = vmatprep.subr.mxu0 0.0
      %490 = vmatpush2.msra.mxu0 0.0
      %491 = vmatprep.subr.mxu0 0.0
      %492 = vmatpush2.msra.mxu0 0.0
      %493 = vmatprep.subr.mxu0 0.0
      %494 = vmatpush2.msra.mxu0 0.0
      %495 = vmatprep.subr.mxu0 0.0
      %496 = vmatpush2.msra.mxu0 0.0
      %497 = vmatprep.subr.mxu0 0.0
      %498 = vmatpush2.msra.mxu0 0.0
      %499 = vmatprep.subr.mxu0 0.0
      %500 = vmatpush2.msra.mxu0 0.0
      %501 = vmatprep.subr.mxu0 0.0
      %502 = vmatpush2.msra.mxu0 0.0
      %503 = vmatprep.subr.mxu0 0.0
      %504 = vmatpush2.msra.mxu0 0.0
      %505 = vmatprep.subr.mxu0 0.0
      %506 = vmatpush2.msra.mxu0 0.0
      %507 = vmatprep.subr.mxu0 0.0
      %508 = vmatpush2.msra.mxu0 0.0
      %509 = vmatprep.subr.mxu0 0.0
      %510 = vmatpush2.msra.mxu0 0.0
      %511 = vmatprep.subr.mxu0 0.0
      %512 = vmatpush2.msra.mxu0 0.0
      %513 = vmatprep.subr.mxu0 0.0
      %514 = vmatpush2.msra.mxu0 0.0
      %515 = vmatprep.subr.mxu0 0.0
      %516 = vmatpush2.msra.mxu0 0.0
      %517 = vmatprep.mubr.f32.mxu0 0.0
      %518 = vmatmul.mubr.f32.gmra.mxu0 %v448
      %v519 = vpop.f32.mrf.mxu0
      %v520 = vadd.f32 0.0, %v519
      %v521 = vpop.f32.mrf.mxu0
      %522 = vmatprep.mubr.f32.mxu0 0.0
      %523 = vmatmul.mubr.f32.gmra.mxu0 %v451
      %v524 = vpop.f32.mrf.mxu0
      %v525 = vadd.f32 0.0, %v524
      %v526 = vpop.f32.mrf.mxu0
      %527 = vdwg.mxu0
      %v528 = vld [vmem:[%s4] sm:$0xff]
      %v529 = vld [vmem:[%s5] sm:$0xff]
      %v530 = vld [vmem:[%s5 + $0x8] sm:$0xff]
      %533 = vrot.lane.b32.xlu0 %v520, 120
      %v534 = vpop.permute.xlu0 %533
      %535 = vrot.lane.b32.xlu0 %v525, 120
      %v536 = vpop.permute.xlu0 %535
      %vm537 = vcmask 64512
      %v538 = vsel %vm537, %v534, 0
      %v540 = vsel %vm537, %v536, 0
      %542 = vmatprep.subr.mxu0 0.0
      %543 = vmatpush1.msra.mxu0 0.0
      %544 = vmatprep.subr.mxu0 0.0
      %545 = vmatpush1.msra.mxu0 0.0
      %546 = vmatprep.subr.mxu0 0.0
      %547 = vmatpush1.msra.mxu0 0.0
      %548 = vmatprep.subr.mxu0 0.0
      %549 = vmatpush1.msra.mxu0 0.0
      %550 = vmatprep.subr.mxu0 0.0
      %551 = vmatpush1.msra.mxu0 0.0
      %552 = vmatprep.subr.mxu0 0.0
      %553 = vmatpush1.msra.mxu0 0.0
      %554 = vmatprep.subr.mxu0 0.0
      %555 = vmatpush1.msra.mxu0 0.0
      %556 = vmatprep.subr.mxu0 0.0
      %557 = vmatpush1.msra.mxu0 0.0
      %558 = vmatprep.subr.mxu0 0.0
      %559 = vmatpush1.msra.mxu0 0.0
      %560 = vmatprep.subr.mxu0 0.0
      %561 = vmatpush1.msra.mxu0 0.0
      %562 = vmatprep.subr.mxu0 0.0
      %563 = vmatpush1.msra.mxu0 0.0
      %564 = vmatprep.subr.mxu0 0.0
      %565 = vmatpush1.msra.mxu0 0.0
      %566 = vmatprep.subr.mxu0 0.0
      %567 = vmatpush1.msra.mxu0 0.0
      %568 = vmatprep.subr.mxu0 0.0
      %569 = vmatpush1.msra.mxu0 0.0
      %570 = vmatprep.subr.mxu0 0.0
      %571 = vmatpush1.msra.mxu0 0.0
      %572 = vmatprep.subr.mxu0 0.0
      %573 = vmatpush1.msra.mxu0 %v528
      %574 = vmatprep.subr.mxu0 0.0
      %575 = vmatpush2.msra.mxu0 0.0
      %576 = vmatprep.subr.mxu0 0.0
      %577 = vmatpush2.msra.mxu0 0.0
      %578 = vmatprep.subr.mxu0 0.0
      %579 = vmatpush2.msra.mxu0 0.0
      %580 = vmatprep.subr.mxu0 0.0
      %581 = vmatpush2.msra.mxu0 0.0
      %582 = vmatprep.subr.mxu0 0.0
      %583 = vmatpush2.msra.mxu0 0.0
      %584 = vmatprep.subr.mxu0 0.0
      %585 = vmatpush2.msra.mxu0 0.0
      %586 = vmatprep.subr.mxu0 0.0
      %587 = vmatpush2.msra.mxu0 0.0
      %588 = vmatprep.subr.mxu0 0.0
      %589 = vmatpush2.msra.mxu0 0.0
      %590 = vmatprep.subr.mxu0 0.0
      %591 = vmatpush2.msra.mxu0 0.0
      %592 = vmatprep.subr.mxu0 0.0
      %593 = vmatpush2.msra.mxu0 0.0
      %594 = vmatprep.subr.mxu0 0.0
      %595 = vmatpush2.msra.mxu0 0.0
      %596 = vmatprep.subr.mxu0 0.0
      %597 = vmatpush2.msra.mxu0 0.0
      %598 = vmatprep.subr.mxu0 0.0
      %599 = vmatpush2.msra.mxu0 0.0
      %600 = vmatprep.subr.mxu0 0.0
      %601 = vmatpush2.msra.mxu0 0.0
      %602 = vmatprep.subr.mxu0 0.0
      %603 = vmatpush2.msra.mxu0 0.0
      %604 = vmatprep.subr.mxu0 0.0
      %605 = vmatpush2.msra.mxu0 0.0
      %606 = vmatprep.mubr.f32.mxu0 0.0
      %607 = vmatmul.mubr.f32.gmra.mxu0 %v538
      %v608 = vpop.f32.mrf.mxu0
      %v609 = vadd.f32 0.0, %v608
      %v610 = vpop.f32.mrf.mxu0
      %611 = vmatprep.mubr.f32.mxu0 0.0
      %612 = vmatmul.mubr.f32.gmra.mxu0 %v540
      %v613 = vpop.f32.mrf.mxu0
      %v614 = vadd.f32 0.0, %v613
      %v615 = vpop.f32.mrf.mxu0
      %616 = vdwg.mxu0
      %v617 = vmul.f32 %v609, %v529
      %v618 = vmul.f32 %v614, %v530
      %v619 = vadd.f32 %v617, %v618
      %v620 = vrot.slane %v619, 4
      %v621 = vadd.f32 %v619, %v620
      %v622 = vrot.slane %v621, 2
      %v623 = vadd.f32 %v621, %v622
      %v624 = vrot.slane %v623, 1
      %v625 = vadd.f32 %v623, %v624
      %v626 = vsel %vm537, %v520, 0
      %v628 = vsel %vm537, %v525, 0
      %630 = vmatprep.subr.mxu0 0.0
      %631 = vmatpush1.msra.mxu0 0.0
      %632 = vmatprep.subr.mxu0 0.0
      %633 = vmatpush1.msra.mxu0 0.0
      %634 = vmatprep.subr.mxu0 0.0
      %635 = vmatpush1.msra.mxu0 0.0
      %636 = vmatprep.subr.mxu0 0.0
      %637 = vmatpush1.msra.mxu0 0.0
      %638 = vmatprep.subr.mxu0 0.0
      %639 = vmatpush1.msra.mxu0 0.0
      %640 = vmatprep.subr.mxu0 0.0
      %641 = vmatpush1.msra.mxu0 0.0
      %642 = vmatprep.subr.mxu0 0.0
      %643 = vmatpush1.msra.mxu0 0.0
      %644 = vmatprep.subr.mxu0 0.0
      %645 = vmatpush1.msra.mxu0 0.0
      %646 = vmatprep.subr.mxu0 0.0
      %647 = vmatpush1.msra.mxu0 0.0
      %648 = vmatprep.subr.mxu0 0.0
      %649 = vmatpush1.msra.mxu0 0.0
      %650 = vmatprep.subr.mxu0 0.0
      %651 = vmatpush1.msra.mxu0 0.0
      %652 = vmatprep.subr.mxu0 0.0
      %653 = vmatpush1.msra.mxu0 0.0
      %654 = vmatprep.subr.mxu0 0.0
      %655 = vmatpush1.msra.mxu0 0.0
      %656 = vmatprep.subr.mxu0 0.0
      %657 = vmatpush1.msra.mxu0 0.0
      %658 = vmatprep.subr.mxu0 0.0
      %659 = vmatpush1.msra.mxu0 0.0
      %660 = vmatprep.subr.mxu0 0.0
      %661 = vmatpush1.msra.mxu0 %v528
      %662 = vmatprep.subr.mxu0 0.0
      %663 = vmatpush2.msra.mxu0 0.0
      %664 = vmatprep.subr.mxu0 0.0
      %665 = vmatpush2.msra.mxu0 0.0
      %666 = vmatprep.subr.mxu0 0.0
      %667 = vmatpush2.msra.mxu0 0.0
      %668 = vmatprep.subr.mxu0 0.0
      %669 = vmatpush2.msra.mxu0 0.0
      %670 = vmatprep.subr.mxu0 0.0
      %671 = vmatpush2.msra.mxu0 0.0
      %672 = vmatprep.subr.mxu0 0.0
      %673 = vmatpush2.msra.mxu0 0.0
      %674 = vmatprep.subr.mxu0 0.0
      %675 = vmatpush2.msra.mxu0 0.0
      %676 = vmatprep.subr.mxu0 0.0
      %677 = vmatpush2.msra.mxu0 0.0
      %678 = vmatprep.subr.mxu0 0.0
      %679 = vmatpush2.msra.mxu0 0.0
      %680 = vmatprep.subr.mxu0 0.0
      %681 = vmatpush2.msra.mxu0 0.0
      %682 = vmatprep.subr.mxu0 0.0
      %683 = vmatpush2.msra.mxu0 0.0
      %684 = vmatprep.subr.mxu0 0.0
      %685 = vmatpush2.msra.mxu0 0.0
      %686 = vmatprep.subr.mxu0 0.0
      %687 = vmatpush2.msra.mxu0 0.0
      %688 = vmatprep.subr.mxu0 0.0
      %689 = vmatpush2.msra.mxu0 0.0
      %690 = vmatprep.subr.mxu0 0.0
      %691 = vmatpush2.msra.mxu0 0.0
      %692 = vmatprep.subr.mxu0 0.0
      %693 = vmatpush2.msra.mxu0 0.0
      %694 = vmatprep.mubr.f32.mxu0 0.0
      %695 = vmatmul.mubr.f32.gmra.mxu0 %v626
      %v696 = vpop.f32.mrf.mxu0
      %v697 = vadd.f32 %v625, %v696
      %v698 = vpop.f32.mrf.mxu0
      %699 = vmatprep.mubr.f32.mxu0 0.0
      %700 = vmatmul.mubr.f32.gmra.mxu0 %v628
      %v701 = vpop.f32.mrf.mxu0
      %v702 = vadd.f32 %v625, %v701
      %v703 = vpop.f32.mrf.mxu0
      %704 = vdwg.mxu0
      %vm705 = vcmp.gt.f32.partialorder %v697, 0.0
      %vm706 = vcmp.gt.f32.partialorder %v702, 0.0
      %v707 = vmul.f32 %v697, 0.2
      %v708 = vmul.f32 %v702, 0.2
      %v709 = vsel %vm705, %v697, %v707
      %v710 = vsel %vm706, %v702, %v708
      %vm711 = vcmp.gt.f32.partialorder %v355, 0.0
      %vm712 = vcmp.gt.f32.partialorder %v356, 0.0
      %v713 = vsel %vm711, 0.0, -1e+09
      %v714 = vsel %vm712, 0.0, -1e+09
      %vm715 = vcmask 130048
      %v717 = vsel %vm715, %v713, 0
      %v720 = vsel %vm715, %v714, 0
      %722 = vmatprep.subr.mxu0 0.0
      %723 = vmatpush1.msra.mxu0 0.0
      %724 = vmatprep.subr.mxu0 0.0
      %725 = vmatpush1.msra.mxu0 0.0
      %726 = vmatprep.subr.mxu0 0.0
      %727 = vmatpush1.msra.mxu0 0.0
      %728 = vmatprep.subr.mxu0 0.0
      %729 = vmatpush1.msra.mxu0 0.0
      %730 = vmatprep.subr.mxu0 0.0
      %731 = vmatpush1.msra.mxu0 0.0
      %732 = vmatprep.subr.mxu0 0.0
      %733 = vmatpush1.msra.mxu0 0.0
      %734 = vmatprep.subr.mxu0 0.0
      %735 = vmatpush1.msra.mxu0 0.0
      %736 = vmatprep.subr.mxu0 0.0
      %737 = vmatpush1.msra.mxu0 0.0
      %738 = vmatprep.subr.mxu0 0.0
      %739 = vmatpush1.msra.mxu0 0.0
      %740 = vmatprep.subr.mxu0 0.0
      %741 = vmatpush1.msra.mxu0 0.0
      %742 = vmatprep.subr.mxu0 0.0
      %743 = vmatpush1.msra.mxu0 0.0
      %744 = vmatprep.subr.mxu0 0.0
      %745 = vmatpush1.msra.mxu0 0.0
      %746 = vmatprep.subr.mxu0 0.0
      %747 = vmatpush1.msra.mxu0 0.0
      %748 = vmatprep.subr.mxu0 0.0
      %749 = vmatpush1.msra.mxu0 0.0
      %750 = vmatprep.subr.mxu0 0.0
      %751 = vmatpush1.msra.mxu0 %v530
      %752 = vmatprep.subr.mxu0 0.0
      %753 = vmatpush1.msra.mxu0 %v529
      %754 = vmatprep.subr.mxu0 0.0
      %755 = vmatpush2.msra.mxu0 0.0
      %756 = vmatprep.subr.mxu0 0.0
      %757 = vmatpush2.msra.mxu0 0.0
      %758 = vmatprep.subr.mxu0 0.0
      %759 = vmatpush2.msra.mxu0 0.0
      %760 = vmatprep.subr.mxu0 0.0
      %761 = vmatpush2.msra.mxu0 0.0
      %762 = vmatprep.subr.mxu0 0.0
      %763 = vmatpush2.msra.mxu0 0.0
      %764 = vmatprep.subr.mxu0 0.0
      %765 = vmatpush2.msra.mxu0 0.0
      %766 = vmatprep.subr.mxu0 0.0
      %767 = vmatpush2.msra.mxu0 0.0
      %768 = vmatprep.subr.mxu0 0.0
      %769 = vmatpush2.msra.mxu0 0.0
      %770 = vmatprep.subr.mxu0 0.0
      %771 = vmatpush2.msra.mxu0 0.0
      %772 = vmatprep.subr.mxu0 0.0
      %773 = vmatpush2.msra.mxu0 0.0
      %774 = vmatprep.subr.mxu0 0.0
      %775 = vmatpush2.msra.mxu0 0.0
      %776 = vmatprep.subr.mxu0 0.0
      %777 = vmatpush2.msra.mxu0 0.0
      %778 = vmatprep.subr.mxu0 0.0
      %779 = vmatpush2.msra.mxu0 0.0
      %780 = vmatprep.subr.mxu0 0.0
      %781 = vmatpush2.msra.mxu0 0.0
      %782 = vmatprep.subr.mxu0 0.0
      %783 = vmatpush2.msra.mxu0 0.0
      %784 = vmatprep.subr.mxu0 0.0
      %785 = vmatpush2.msra.mxu0 0.0
      %786 = vmatprep.mubr.f32.mxu0 0.0
      %787 = vmatmul.mubr.f32.gmra.mxu0 %v717
      %v788 = vpop.f32.mrf.mxu0
      %v789 = vadd.f32 0.0, %v788
      %v790 = vpop.f32.mrf.mxu0
      %791 = vmatprep.mubr.f32.mxu0 0.0
      %792 = vmatmul.mubr.f32.gmra.mxu0 %v720
      %v793 = vpop.f32.mrf.mxu0
      %v794 = vadd.f32 0.0, %v793
      %v795 = vpop.f32.mrf.mxu0
      %796 = vdwg.mxu0
      %v797 = vadd.f32 %v709, %v789
      %v798 = vadd.f32 %v710, %v794
      %799 = vmax.xlane.f32.xlu0 %v797
      %v800 = vpop.xlane.xlu0 %799
      %801 = vmax.xlane.f32.xlu0 %v798
      %v802 = vpop.xlane.xlu0 %801
      %v803 = vsub.f32 %v797, %v800
      %v804 = vsub.f32 %v798, %v802
      %v805 = vmul.f32 %v803, 1.442695
      %v806 = vpow.pop %v805
      %v807 = vmul.f32 %v804, 1.442695
      %v808 = vpow.pop %v807
      %v809 = vld [vmem:[%s6] sm:$0xff]
      %v810 = vld [vmem:[%s6 + $0x8] sm:$0xff]
      %v811 = vld [vmem:[%s6 + $0x10] sm:$0xff]
      %v812 = vld [vmem:[%s6 + $0x18] sm:$0xff]
      %v813 = vld [vmem:[%s6 + $0x20] sm:$0xff]
      %v814 = vld [vmem:[%s6 + $0x28] sm:$0xff]
      %v815 = vld [vmem:[%s6 + $0x30] sm:$0xff]
      %v816 = vld [vmem:[%s6 + $0x38] sm:$0xff]
      %v817 = vld [vmem:[%s6 + $0x40] sm:$0xff]
      %v818 = vld [vmem:[%s6 + $0x48] sm:$0xff]
      %v819 = vld [vmem:[%s6 + $0x50] sm:$0xff]
      %v820 = vld [vmem:[%s6 + $0x58] sm:$0xff]
      %v821 = vld [vmem:[%s6 + $0x60] sm:$0xff]
      %v822 = vld [vmem:[%s6 + $0x68] sm:$0xff]
      %v823 = vld [vmem:[%s6 + $0x70] sm:$0xff]
      %v824 = vld [vmem:[%s6 + $0x78] sm:$0xff]
      %825 = vmatprep.subr.mxu0 0.0
      %826 = vmatpush1.msra.mxu0 %v824
      %827 = vmatprep.subr.mxu0 0.0
      %828 = vmatpush1.msra.mxu0 %v823
      %829 = vmatprep.subr.mxu0 0.0
      %830 = vmatpush1.msra.mxu0 %v822
      %831 = vmatprep.subr.mxu0 0.0
      %832 = vmatpush1.msra.mxu0 %v821
      %833 = vmatprep.subr.mxu0 0.0
      %834 = vmatpush1.msra.mxu0 %v820
      %835 = vmatprep.subr.mxu0 0.0
      %836 = vmatpush1.msra.mxu0 %v819
      %837 = vmatprep.subr.mxu0 0.0
      %838 = vmatpush1.msra.mxu0 %v818
      %839 = vmatprep.subr.mxu0 0.0
      %840 = vmatpush1.msra.mxu0 %v817
      %841 = vmatprep.subr.mxu0 0.0
      %842 = vmatpush1.msra.mxu0 %v816
      %843 = vmatprep.subr.mxu0 0.0
      %844 = vmatpush1.msra.mxu0 %v815
      %845 = vmatprep.subr.mxu0 0.0
      %846 = vmatpush1.msra.mxu0 %v814
      %847 = vmatprep.subr.mxu0 0.0
      %848 = vmatpush1.msra.mxu0 %v813
      %849 = vmatprep.subr.mxu0 0.0
      %850 = vmatpush1.msra.mxu0 %v812
      %851 = vmatprep.subr.mxu0 0.0
      %852 = vmatpush1.msra.mxu0 %v811
      %853 = vmatprep.subr.mxu0 0.0
      %854 = vmatpush1.msra.mxu0 %v810
      %855 = vmatprep.subr.mxu0 0.0
      %856 = vmatpush1.msra.mxu0 %v809
      %857 = vmatprep.subr.mxu0 0.0
      %858 = vmatpush2.msra.mxu0 0.0
      %859 = vmatprep.subr.mxu0 0.0
      %860 = vmatpush2.msra.mxu0 0.0
      %861 = vmatprep.subr.mxu0 0.0
      %862 = vmatpush2.msra.mxu0 0.0
      %863 = vmatprep.subr.mxu0 0.0
      %864 = vmatpush2.msra.mxu0 0.0
      %865 = vmatprep.subr.mxu0 0.0
      %866 = vmatpush2.msra.mxu0 0.0
      %867 = vmatprep.subr.mxu0 0.0
      %868 = vmatpush2.msra.mxu0 0.0
      %869 = vmatprep.subr.mxu0 0.0
      %870 = vmatpush2.msra.mxu0 0.0
      %871 = vmatprep.subr.mxu0 0.0
      %872 = vmatpush2.msra.mxu0 0.0
      %873 = vmatprep.subr.mxu0 0.0
      %874 = vmatpush2.msra.mxu0 0.0
      %875 = vmatprep.subr.mxu0 0.0
      %876 = vmatpush2.msra.mxu0 0.0
      %877 = vmatprep.subr.mxu0 0.0
      %878 = vmatpush2.msra.mxu0 0.0
      %879 = vmatprep.subr.mxu0 0.0
      %880 = vmatpush2.msra.mxu0 0.0
      %881 = vmatprep.subr.mxu0 0.0
      %882 = vmatpush2.msra.mxu0 0.0
      %883 = vmatprep.subr.mxu0 0.0
      %884 = vmatpush2.msra.mxu0 0.0
      %885 = vmatprep.subr.mxu0 0.0
      %886 = vmatpush2.msra.mxu0 0.0
      %887 = vmatprep.subr.mxu0 0.0
      %888 = vmatpush2.msra.mxu0 0.0
      %889 = vmatprep.mubr.f32.mxu0 0.0
      %890 = vmatmul.mubr.f32.gmra.mxu0 %v806
      %v891 = vpop.f32.mrf.mxu0
      %v892 = vadd.f32 0.0, %v891
      %v893 = vpop.f32.mrf.mxu0
      %894 = vmatprep.mubr.f32.mxu0 0.0
      %895 = vmatmul.mubr.f32.gmra.mxu0 %v808
      %v896 = vpop.f32.mrf.mxu0
      %v897 = vadd.f32 0.0, %v896
      %v898 = vpop.f32.mrf.mxu0
      %899 = vdwg.mxu0
      %v900 = vrcp.pop %v892
      %v901 = vrcp.pop %v897
      %v903 = vsel %vm537, %v900, 0
      %v906 = vsel %vm537, %v901, 0
      %908 = vmatprep.subr.mxu0 0.0
      %909 = vmatpush1.msra.mxu0 0.0
      %910 = vmatprep.subr.mxu0 0.0
      %911 = vmatpush1.msra.mxu0 0.0
      %912 = vmatprep.subr.mxu0 0.0
      %913 = vmatpush1.msra.mxu0 0.0
      %914 = vmatprep.subr.mxu0 0.0
      %915 = vmatpush1.msra.mxu0 0.0
      %916 = vmatprep.subr.mxu0 0.0
      %917 = vmatpush1.msra.mxu0 0.0
      %918 = vmatprep.subr.mxu0 0.0
      %919 = vmatpush1.msra.mxu0 0.0
      %920 = vmatprep.subr.mxu0 0.0
      %921 = vmatpush1.msra.mxu0 0.0
      %922 = vmatprep.subr.mxu0 0.0
      %923 = vmatpush1.msra.mxu0 0.0
      %924 = vmatprep.subr.mxu0 0.0
      %925 = vmatpush1.msra.mxu0 0.0
      %926 = vmatprep.subr.mxu0 0.0
      %927 = vmatpush1.msra.mxu0 0.0
      %928 = vmatprep.subr.mxu0 0.0
      %929 = vmatpush1.msra.mxu0 0.0
      %930 = vmatprep.subr.mxu0 0.0
      %931 = vmatpush1.msra.mxu0 0.0
      %932 = vmatprep.subr.mxu0 0.0
      %933 = vmatpush1.msra.mxu0 0.0
      %934 = vmatprep.subr.mxu0 0.0
      %935 = vmatpush1.msra.mxu0 0.0
      %936 = vmatprep.subr.mxu0 0.0
      %937 = vmatpush1.msra.mxu0 0.0
      %938 = vmatprep.subr.mxu0 0.0
      %939 = vmatpush1.msra.mxu0 %v528
      %940 = vmatprep.subr.mxu0 0.0
      %941 = vmatpush2.msra.mxu0 0.0
      %942 = vmatprep.subr.mxu0 0.0
      %943 = vmatpush2.msra.mxu0 0.0
      %944 = vmatprep.subr.mxu0 0.0
      %945 = vmatpush2.msra.mxu0 0.0
      %946 = vmatprep.subr.mxu0 0.0
      %947 = vmatpush2.msra.mxu0 0.0
      %948 = vmatprep.subr.mxu0 0.0
      %949 = vmatpush2.msra.mxu0 0.0
      %950 = vmatprep.subr.mxu0 0.0
      %951 = vmatpush2.msra.mxu0 0.0
      %952 = vmatprep.subr.mxu0 0.0
      %953 = vmatpush2.msra.mxu0 0.0
      %954 = vmatprep.subr.mxu0 0.0
      %955 = vmatpush2.msra.mxu0 0.0
      %956 = vmatprep.subr.mxu0 0.0
      %957 = vmatpush2.msra.mxu0 0.0
      %958 = vmatprep.subr.mxu0 0.0
      %959 = vmatpush2.msra.mxu0 0.0
      %960 = vmatprep.subr.mxu0 0.0
      %961 = vmatpush2.msra.mxu0 0.0
      %962 = vmatprep.subr.mxu0 0.0
      %963 = vmatpush2.msra.mxu0 0.0
      %964 = vmatprep.subr.mxu0 0.0
      %965 = vmatpush2.msra.mxu0 0.0
      %966 = vmatprep.subr.mxu0 0.0
      %967 = vmatpush2.msra.mxu0 0.0
      %968 = vmatprep.subr.mxu0 0.0
      %969 = vmatpush2.msra.mxu0 0.0
      %970 = vmatprep.subr.mxu0 0.0
      %971 = vmatpush2.msra.mxu0 0.0
      %972 = vmatprep.mubr.f32.mxu0 0.0
      %973 = vmatmul.mubr.f32.gmra.mxu0 %v903
      %v974 = vpop.f32.mrf.mxu0
      %v975 = vadd.f32 0.0, %v974
      %v976 = vpop.f32.mrf.mxu0
      %977 = vmatprep.mubr.f32.mxu0 0.0
      %978 = vmatmul.mubr.f32.gmra.mxu0 %v906
      %v979 = vpop.f32.mrf.mxu0
      %v980 = vadd.f32 0.0, %v979
      %v981 = vpop.f32.mrf.mxu0
      %982 = vdwg.mxu0
      %v983 = vmul.f32 %v806, %v975
      %v984 = vmul.f32 %v808, %v980
      %v985 = vld [vmem:[%s7] sm:$0xff]
      %v986 = vld [vmem:[%s7 + $0x8] sm:$0xff]
      %v987 = vld [vmem:[%s7 + $0x10] sm:$0xff]
      %v988 = vld [vmem:[%s7 + $0x18] sm:$0xff]
      %v989 = vld [vmem:[%s7 + $0x20] sm:$0xff]
      %v990 = vld [vmem:[%s7 + $0x28] sm:$0xff]
      %v991 = vld [vmem:[%s7 + $0x30] sm:$0xff]
      %v992 = vld [vmem:[%s7 + $0x38] sm:$0xff]
      %v993 = vld [vmem:[%s7 + $0x40] sm:$0xff]
      %v994 = vld [vmem:[%s7 + $0x48] sm:$0xff]
      %v995 = vld [vmem:[%s7 + $0x50] sm:$0xff]
      %v996 = vld [vmem:[%s7 + $0x58] sm:$0xff]
      %v997 = vld [vmem:[%s7 + $0x60] sm:$0xff]
      %v998 = vld [vmem:[%s7 + $0x68] sm:$0xff]
      %v999 = vld [vmem:[%s7 + $0x70] sm:$0xff]
      %v1000 = vld [vmem:[%s7 + $0x78] sm:$0xff]
      %v1002 = vsel %vm715, %v985, 0
      %v1005 = vsel %vm715, %v986, 0
      %v1008 = vsel %vm715, %v987, 0
      %v1011 = vsel %vm715, %v988, 0
      %v1014 = vsel %vm715, %v989, 0
      %v1017 = vsel %vm715, %v990, 0
      %v1020 = vsel %vm715, %v991, 0
      %v1023 = vsel %vm715, %v992, 0
      %v1026 = vsel %vm715, %v993, 0
      %v1029 = vsel %vm715, %v994, 0
      %v1032 = vsel %vm715, %v995, 0
      %v1035 = vsel %vm715, %v996, 0
      %v1038 = vsel %vm715, %v997, 0
      %v1041 = vsel %vm715, %v998, 0
      %v1044 = vsel %vm715, %v999, 0
      %v1047 = vsel %vm715, %v1000, 0
      %1049 = vmatprep.subr.mxu0 0.0
      %1050 = vmatpush1.msra.mxu0 0.0
      %1051 = vmatprep.subr.mxu0 0.0
      %1052 = vmatpush1.msra.mxu0 0.0
      %1053 = vmatprep.subr.mxu0 0.0
      %1054 = vmatpush1.msra.mxu0 0.0
      %1055 = vmatprep.subr.mxu0 0.0
      %1056 = vmatpush1.msra.mxu0 0.0
      %1057 = vmatprep.subr.mxu0 0.0
      %1058 = vmatpush1.msra.mxu0 0.0
      %1059 = vmatprep.subr.mxu0 0.0
      %1060 = vmatpush1.msra.mxu0 0.0
      %1061 = vmatprep.subr.mxu0 0.0
      %1062 = vmatpush1.msra.mxu0 0.0
      %1063 = vmatprep.subr.mxu0 0.0
      %1064 = vmatpush1.msra.mxu0 0.0
      %1065 = vmatprep.subr.mxu0 0.0
      %1066 = vmatpush1.msra.mxu0 0.0
      %1067 = vmatprep.subr.mxu0 0.0
      %1068 = vmatpush1.msra.mxu0 0.0
      %1069 = vmatprep.subr.mxu0 0.0
      %1070 = vmatpush1.msra.mxu0 0.0
      %1071 = vmatprep.subr.mxu0 0.0
      %1072 = vmatpush1.msra.mxu0 0.0
      %1073 = vmatprep.subr.mxu0 0.0
      %1074 = vmatpush1.msra.mxu0 0.0
      %1075 = vmatprep.subr.mxu0 0.0
      %1076 = vmatpush1.msra.mxu0 0.0
      %1077 = vmatprep.subr.mxu0 0.0
      %1078 = vmatpush1.msra.mxu0 %v440
      %1079 = vmatprep.subr.mxu0 0.0
      %1080 = vmatpush1.msra.mxu0 %v435
      %1081 = vmatprep.subr.mxu0 0.0
      %1082 = vmatpush2.msra.mxu0 0.0
      %1083 = vmatprep.subr.mxu0 0.0
      %1084 = vmatpush2.msra.mxu0 0.0
      %1085 = vmatprep.subr.mxu0 0.0
      %1086 = vmatpush2.msra.mxu0 0.0
      %1087 = vmatprep.subr.mxu0 0.0
      %1088 = vmatpush2.msra.mxu0 0.0
      %1089 = vmatprep.subr.mxu0 0.0
      %1090 = vmatpush2.msra.mxu0 0.0
      %1091 = vmatprep.subr.mxu0 0.0
      %1092 = vmatpush2.msra.mxu0 0.0
      %1093 = vmatprep.subr.mxu0 0.0
      %1094 = vmatpush2.msra.mxu0 0.0
      %1095 = vmatprep.subr.mxu0 0.0
      %1096 = vmatpush2.msra.mxu0 0.0
      %1097 = vmatprep.subr.mxu0 0.0
      %1098 = vmatpush2.msra.mxu0 0.0
      %1099 = vmatprep.subr.mxu0 0.0
      %1100 = vmatpush2.msra.mxu0 0.0
      %1101 = vmatprep.subr.mxu0 0.0
      %1102 = vmatpush2.msra.mxu0 0.0
      %1103 = vmatprep.subr.mxu0 0.0
      %1104 = vmatpush2.msra.mxu0 0.0
      %1105 = vmatprep.subr.mxu0 0.0
      %1106 = vmatpush2.msra.mxu0 0.0
      %1107 = vmatprep.subr.mxu0 0.0
      %1108 = vmatpush2.msra.mxu0 0.0
      %1109 = vmatprep.subr.mxu0 0.0
      %1110 = vmatpush2.msra.mxu0 0.0
      %1111 = vmatprep.subr.mxu0 0.0
      %1112 = vmatpush2.msra.mxu0 0.0
      %1113 = vmatprep.mubr.f32.mxu0 0.0
      %1114 = vmatmul.mubr.f32.gmra.mxu0 %v1002
      %v1115 = vpop.f32.mrf.mxu0
      %v1116 = vadd.f32 0.0, %v1115
      %v1117 = vpop.f32.mrf.mxu0
      %1118 = vmatprep.mubr.f32.mxu0 0.0
      %1119 = vmatmul.mubr.f32.gmra.mxu0 %v1005
      %v1120 = vpop.f32.mrf.mxu0
      %v1121 = vadd.f32 0.0, %v1120
      %v1122 = vpop.f32.mrf.mxu0
      %1123 = vmatprep.mubr.f32.mxu0 0.0
      %1124 = vmatmul.mubr.f32.gmra.mxu0 %v1008
      %v1125 = vpop.f32.mrf.mxu0
      %v1126 = vadd.f32 0.0, %v1125
      %v1127 = vpop.f32.mrf.mxu0
      %1128 = vmatprep.mubr.f32.mxu0 0.0
      %1129 = vmatmul.mubr.f32.gmra.mxu0 %v1011
      %v1130 = vpop.f32.mrf.mxu0
      %v1131 = vadd.f32 0.0, %v1130
      %v1132 = vpop.f32.mrf.mxu0
      %1133 = vmatprep.mubr.f32.mxu0 0.0
      %1134 = vmatmul.mubr.f32.gmra.mxu0 %v1014
      %v1135 = vpop.f32.mrf.mxu0
      %v1136 = vadd.f32 0.0, %v1135
      %v1137 = vpop.f32.mrf.mxu0
      %1138 = vmatprep.mubr.f32.mxu0 0.0
      %1139 = vmatmul.mubr.f32.gmra.mxu0 %v1017
      %v1140 = vpop.f32.mrf.mxu0
      %v1141 = vadd.f32 0.0, %v1140
      %v1142 = vpop.f32.mrf.mxu0
      %1143 = vmatprep.mubr.f32.mxu0 0.0
      %1144 = vmatmul.mubr.f32.gmra.mxu0 %v1020
      %v1145 = vpop.f32.mrf.mxu0
      %v1146 = vadd.f32 0.0, %v1145
      %v1147 = vpop.f32.mrf.mxu0
      %1148 = vmatprep.mubr.f32.mxu0 0.0
      %1149 = vmatmul.mubr.f32.gmra.mxu0 %v1023
      %v1150 = vpop.f32.mrf.mxu0
      %v1151 = vadd.f32 0.0, %v1150
      %v1152 = vpop.f32.mrf.mxu0
      %1153 = vmatprep.mubr.f32.mxu0 0.0
      %1154 = vmatmul.mubr.f32.gmra.mxu0 %v1026
      %v1155 = vpop.f32.mrf.mxu0
      %v1156 = vadd.f32 0.0, %v1155
      %v1157 = vpop.f32.mrf.mxu0
      %1158 = vmatprep.mubr.f32.mxu0 0.0
      %1159 = vmatmul.mubr.f32.gmra.mxu0 %v1029
      %v1160 = vpop.f32.mrf.mxu0
      %v1161 = vadd.f32 0.0, %v1160
      %v1162 = vpop.f32.mrf.mxu0
      %1163 = vmatprep.mubr.f32.mxu0 0.0
      %1164 = vmatmul.mubr.f32.gmra.mxu0 %v1032
      %v1165 = vpop.f32.mrf.mxu0
      %v1166 = vadd.f32 0.0, %v1165
      %v1167 = vpop.f32.mrf.mxu0
      %1168 = vmatprep.mubr.f32.mxu0 0.0
      %1169 = vmatmul.mubr.f32.gmra.mxu0 %v1035
      %v1170 = vpop.f32.mrf.mxu0
      %v1171 = vadd.f32 0.0, %v1170
      %v1172 = vpop.f32.mrf.mxu0
      %1173 = vmatprep.mubr.f32.mxu0 0.0
      %1174 = vmatmul.mubr.f32.gmra.mxu0 %v1038
      %v1175 = vpop.f32.mrf.mxu0
      %v1176 = vadd.f32 0.0, %v1175
      %v1177 = vpop.f32.mrf.mxu0
      %1178 = vmatprep.mubr.f32.mxu0 0.0
      %1179 = vmatmul.mubr.f32.gmra.mxu0 %v1041
      %v1180 = vpop.f32.mrf.mxu0
      %v1181 = vadd.f32 0.0, %v1180
      %v1182 = vpop.f32.mrf.mxu0
      %1183 = vmatprep.mubr.f32.mxu0 0.0
      %1184 = vmatmul.mubr.f32.gmra.mxu0 %v1044
      %v1185 = vpop.f32.mrf.mxu0
      %v1186 = vadd.f32 0.0, %v1185
      %v1187 = vpop.f32.mrf.mxu0
      %1188 = vmatprep.mubr.f32.mxu0 0.0
      %1189 = vmatmul.mubr.f32.gmra.mxu0 %v1047
      %v1190 = vpop.f32.mrf.mxu0
      %v1191 = vadd.f32 0.0, %v1190
      %v1192 = vpop.f32.mrf.mxu0
      %1193 = vdwg.mxu0
      %v1194 = vld [vmem:[%s8] sm:$0xff]
      %v1195 = vld [vmem:[%s8 + $0x8] sm:$0xff]
      %v1196 = vld [vmem:[%s8 + $0x10] sm:$0xff]
      %v1197 = vld [vmem:[%s8 + $0x18] sm:$0xff]
      %v1198 = vld [vmem:[%s8 + $0x20] sm:$0xff]
      %v1199 = vld [vmem:[%s8 + $0x28] sm:$0xff]
      %v1200 = vld [vmem:[%s8 + $0x30] sm:$0xff]
      %v1201 = vld [vmem:[%s8 + $0x38] sm:$0xff]
      %v1202 = vld [vmem:[%s8 + $0x40] sm:$0xff]
      %v1203 = vld [vmem:[%s8 + $0x48] sm:$0xff]
      %v1204 = vld [vmem:[%s8 + $0x50] sm:$0xff]
      %v1205 = vld [vmem:[%s8 + $0x58] sm:$0xff]
      %v1206 = vld [vmem:[%s8 + $0x60] sm:$0xff]
      %v1207 = vld [vmem:[%s8 + $0x68] sm:$0xff]
      %v1208 = vld [vmem:[%s8 + $0x70] sm:$0xff]
      %v1209 = vld [vmem:[%s8 + $0x78] sm:$0xff]
      %v1210 = vmul.f32 %v1116, %v1194
      %v1211 = vmul.f32 %v1121, %v1195
      %v1212 = vmul.f32 %v1126, %v1196
      %v1213 = vmul.f32 %v1131, %v1197
      %v1214 = vmul.f32 %v1136, %v1198
      %v1215 = vmul.f32 %v1141, %v1199
      %v1216 = vmul.f32 %v1146, %v1200
      %v1217 = vmul.f32 %v1151, %v1201
      %v1218 = vmul.f32 %v1156, %v1202
      %v1219 = vmul.f32 %v1161, %v1203
      %v1220 = vmul.f32 %v1166, %v1204
      %v1221 = vmul.f32 %v1171, %v1205
      %v1222 = vmul.f32 %v1176, %v1206
      %v1223 = vmul.f32 %v1181, %v1207
      %v1224 = vmul.f32 %v1186, %v1208
      %v1225 = vmul.f32 %v1191, %v1209
      %1226 = vmatprep.subr.mxu0 0.0
      %1227 = vmatpush1.msra.mxu0 %v1225
      %1228 = vmatprep.subr.mxu0 0.0
      %1229 = vmatpush1.msra.mxu0 %v1224
      %1230 = vmatprep.subr.mxu0 0.0
      %1231 = vmatpush1.msra.mxu0 %v1223
      %1232 = vmatprep.subr.mxu0 0.0
      %1233 = vmatpush1.msra.mxu0 %v1222
      %1234 = vmatprep.subr.mxu0 0.0
      %1235 = vmatpush1.msra.mxu0 %v1221
      %1236 = vmatprep.subr.mxu0 0.0
      %1237 = vmatpush1.msra.mxu0 %v1220
      %1238 = vmatprep.subr.mxu0 0.0
      %1239 = vmatpush1.msra.mxu0 %v1219
      %1240 = vmatprep.subr.mxu0 0.0
      %1241 = vmatpush1.msra.mxu0 %v1218
      %1242 = vmatprep.subr.mxu0 0.0
      %1243 = vmatpush1.msra.mxu0 %v1217
      %1244 = vmatprep.subr.mxu0 0.0
      %1245 = vmatpush1.msra.mxu0 %v1216
      %1246 = vmatprep.subr.mxu0 0.0
      %1247 = vmatpush1.msra.mxu0 %v1215
      %1248 = vmatprep.subr.mxu0 0.0
      %1249 = vmatpush1.msra.mxu0 %v1214
      %1250 = vmatprep.subr.mxu0 0.0
      %1251 = vmatpush1.msra.mxu0 %v1213
      %1252 = vmatprep.subr.mxu0 0.0
      %1253 = vmatpush1.msra.mxu0 %v1212
      %1254 = vmatprep.subr.mxu0 0.0
      %1255 = vmatpush1.msra.mxu0 %v1211
      %1256 = vmatprep.subr.mxu0 0.0
      %1257 = vmatpush1.msra.mxu0 %v1210
      %1258 = vmatprep.subr.mxu0 0.0
      %1259 = vmatpush2.msra.mxu0 0.0
      %1260 = vmatprep.subr.mxu0 0.0
      %1261 = vmatpush2.msra.mxu0 0.0
      %1262 = vmatprep.subr.mxu0 0.0
      %1263 = vmatpush2.msra.mxu0 0.0
      %1264 = vmatprep.subr.mxu0 0.0
      %1265 = vmatpush2.msra.mxu0 0.0
      %1266 = vmatprep.subr.mxu0 0.0
      %1267 = vmatpush2.msra.mxu0 0.0
      %1268 = vmatprep.subr.mxu0 0.0
      %1269 = vmatpush2.msra.mxu0 0.0
      %1270 = vmatprep.subr.mxu0 0.0
      %1271 = vmatpush2.msra.mxu0 0.0
      %1272 = vmatprep.subr.mxu0 0.0
      %1273 = vmatpush2.msra.mxu0 0.0
      %1274 = vmatprep.subr.mxu0 0.0
      %1275 = vmatpush2.msra.mxu0 0.0
      %1276 = vmatprep.subr.mxu0 0.0
      %1277 = vmatpush2.msra.mxu0 0.0
      %1278 = vmatprep.subr.mxu0 0.0
      %1279 = vmatpush2.msra.mxu0 0.0
      %1280 = vmatprep.subr.mxu0 0.0
      %1281 = vmatpush2.msra.mxu0 0.0
      %1282 = vmatprep.subr.mxu0 0.0
      %1283 = vmatpush2.msra.mxu0 0.0
      %1284 = vmatprep.subr.mxu0 0.0
      %1285 = vmatpush2.msra.mxu0 0.0
      %1286 = vmatprep.subr.mxu0 0.0
      %1287 = vmatpush2.msra.mxu0 0.0
      %1288 = vmatprep.subr.mxu0 0.0
      %1289 = vmatpush2.msra.mxu0 0.0
      %1290 = vmatprep.mubr.f32.mxu0 0.0
      %1291 = vmatmul.mubr.f32.gmra.mxu0 %v983
      %v1292 = vpop.f32.mrf.mxu0
      %v1293 = vadd.f32 0.0, %v1292
      %v1294 = vpop.f32.mrf.mxu0
      %1295 = vmatprep.mubr.f32.mxu0 0.0
      %1296 = vmatmul.mubr.f32.gmra.mxu0 %v984
      %v1297 = vpop.f32.mrf.mxu0
      %v1298 = vadd.f32 0.0, %v1297
      %v1299 = vpop.f32.mrf.mxu0
      %1300 = vdwg.mxu0
      %v1301 = vmul.f32 %v1293, %v1293
      %v1302 = vmul.f32 %v1298, %v1298
      %v1303 = vsel %vm361, %v1301, 0.0
      %1304 = vadd.xlane.f32.xlu0 %v1303
      %v1305 = vpop.xlane.xlu0 %1304
      %v1306 = vsel %vm361, %v1302, 0.0
      %1307 = vadd.xlane.f32.xlu0 %v1306
      %v1308 = vpop.xlane.xlu0 %1307
      %v1309 = vadd.f32 %v1305, 1e-24
      %v1310 = vadd.f32 %v1308, 1e-24
      %v1311 = vrsqrt.pop %v1309
      %v1312 = vrsqrt.pop %v1310
      %v1313 = vmul.f32 %v1293, %v1311
      %v1314 = vmul.f32 %v1298, %v1312
      %1315 = vst.msk [vmem:[%s352] sm:$0xff] %vm361, %v1313
      %1316 = vst.msk [vmem:[%s352 + $0x8] sm:$0xff] %vm361, %v1314
      %p1317 = scmp.lt.s32.totalorder %s20, 1
      %s1318 = scalar_select %p1317, %s20, 1
      %s1319 = smul.addr %s1318, 2
      %s1320 = smul.addr %s1319, 8
      %s1321 = scalar_lea.vmem %s9, %s1320
      // Predicated region
      $region57: #{static_gat_forward.1} parent=55 // pred_check
        %p1322 = pneg %p237
      $region58: #{static_gat_forward.1} parent=55 // pred_check_branch
        %1324 = sbr.rel (%p1322) target = $region60
      $region59: #{static_gat_forward.1} parent=55 // pred_region
        _
      $region60: #{static_gat_forward.1} parent=55 // pred_fallthru
        _
    $region56: #{static_gat_forward.1} parent=5 // pred_fallthru
      _
    %p1325 = scmp.le.s32.totalorder 2, %s15
    // Predicated region
    $region61: #{static_gat_forward.1} parent=5 // pred_check
      %p1326 = pneg %p1325
    $region62: #{static_gat_forward.1} parent=5 // pred_check_branch
      %1328 = sbr.rel (%p1326) target = $region64
    $region63: #{static_gat_forward.1} parent=5 // pred_region
      %s1329 = ssub.s32 %s15, 2
      // Predicated region
      $region65: #{static_gat_forward.1} parent=63 // pred_check
        %p1330 = pneg %p243
      $region66: #{static_gat_forward.1} parent=63 // pred_check_branch
        %1332 = sbr.rel (%p1330) target = $region68
      $region67: #{static_gat_forward.1} parent=63 // pred_region
        %p1333 = scmp.lt.s32.totalorder %s21, 1
        %s1334 = scalar_select %p1333, %s21, 1
        %s1335 = smul.addr %s1334, 2
        %s1336 = smul.addr %s1335, 8
        %s1337 = scalar_lea.vmem %s9, %s1336
      $region68: #{static_gat_forward.1} parent=63 // pred_fallthru
        _
    $region64: #{static_gat_forward.1} parent=5 // pred_fallthru
      _
  $region6: #{static_gat_forward.1} parent=0 // loop_footer
    %s19 = sadd.s32 1, %s15
  $region7: #{static_gat_forward.1} parent=0 // loop_footer_branch
    %14 = sbr.rel target = $region3
  $region8: #{static_gat_forward.1} parent=0 // loop_exit
    _

</llo_original>
